<compile_context>
chip_gen: v7x
topology: tpu7x:2x2x1
jax: 0.10.0
libtpu: 0.0.40
codegen_flags: <defaults>
</compile_context>

<pallas_src>
import math
from functools import partial

import jax
import jax.numpy as jnp
from jax.experimental import pallas as pl
from jax.experimental.pallas import tpu as pltpu


_INV_SQRT2 = 0.7071067811865476  # hoisted GELU constant


# ---------------------------------------------------------------------------
# In-kernel helpers
# ---------------------------------------------------------------------------
def _layernorm(x, w, b, eps=1e-5):
    mean = jnp.mean(x, axis=-1, keepdims=True)
    var = jnp.mean(jnp.square(x - mean), axis=-1, keepdims=True)
    return (x - mean) * jax.lax.rsqrt(var + eps) * w + b


def _gelu_exact(x):
    # torch.nn.GELU default = exact (erf-based) GELU.
    # (On v5e a tanh-approx GELU would move work to the EUP slot, but we keep
    #  the exact form to preserve the module's forward semantics.)
    return 0.5 * x * (1.0 + jax.lax.erf(x * _INV_SQRT2))


# ---------------------------------------------------------------------------
# Pallas kernel: full Block forward for ONE batch element (grid axis = batch)
# ---------------------------------------------------------------------------
def _block_kernel(S, D, H, hd,
                  x_ref,
                  wqkv_ref, bqkv_ref, wo_ref, bo_ref,
                  ln1w_ref, ln1b_ref,
                  w1_ref, w2_ref,
                  ln2w_ref, ln2b_ref,
                  out_ref, attn_ref):
    x = x_ref[...]                                       # (S, D) f32
    x_bf = x.astype(jnp.bfloat16)

    # ---- fused QKV projection: one (S, D) @ (D, 3D) MXU contraction (K = D) ----
    qkv = jnp.dot(x_bf, wqkv_ref[...], preferred_element_type=jnp.float32)
    qkv = qkv + bqkv_ref[...]                            # (S, 3D) f32

    # ---- split heads ONCE: (S, 3D) -> (S, 3H, hd) -> (3H, S, hd) ----
    qkv_h = jnp.transpose(qkv.reshape(S, 3 * H, hd), (1, 0, 2))
    q = qkv_h[:H].astype(jnp.bfloat16)                   # (H, S, hd)
    k = qkv_h[H:2 * H].astype(jnp.bfloat16)              # (H, S, hd)
    v = qkv_h[2 * H:].astype(jnp.bfloat16)               # (H, S, hd)

    # ---- causal mask (bool select, no f32 add-mask tensor) ----
    row = jax.lax.broadcasted_iota(jnp.int32, (S, S), 0)
    col = jax.lax.broadcasted_iota(jnp.int32, (S, S), 1)
    causal = (col <= row)[None]                          # (1, S, S)

    # ---- attention for ALL heads in one batched einsum ----
    logits = jnp.einsum("hqd,hkd->hqk", q, k,
                        preferred_element_type=jnp.float32)
    logits = logits * jnp.float32(1.0 / math.sqrt(hd))
    logits = jnp.where(causal, logits, jnp.float32(-1e20))

    m = jnp.max(logits, axis=-1, keepdims=True)          # stable softmax
    e = jnp.exp(logits - m)
    denom = jnp.sum(e, axis=-1, keepdims=True)
    w = e * pl.reciprocal(denom, approx=True)            # (H, S, S) f32

    # single direct store of this batch's attention weights (bf16 writeback)
    attn_ref[...] = w.astype(attn_ref.dtype)

    ctx = jnp.einsum("hqk,hkd->hqd", w.astype(jnp.bfloat16), v,
                     preferred_element_type=jnp.float32)  # (H, S, hd)
    ctx = jnp.transpose(ctx, (1, 0, 2)).reshape(S, D)     # merge heads -> (S, D)

    # ---- single output projection (S, D) @ (D, D) ----
    attn_out = jnp.dot(ctx.astype(jnp.bfloat16), wo_ref[...],
                       preferred_element_type=jnp.float32) + bo_ref[...]

    a1 = _layernorm(x + attn_out, ln1w_ref[...], ln1b_ref[...])

    # ---- FFN ----
    h1 = _gelu_exact(jnp.dot(a1.astype(jnp.bfloat16), w1_ref[...],
                             preferred_element_type=jnp.float32))
    a2 = jnp.dot(h1.astype(jnp.bfloat16), w2_ref[...],
                 preferred_element_type=jnp.float32)
    # TODO(synk): ffn_drop (nn.Dropout) applied as eval-mode identity (no RNG).
    out_ref[...] = _layernorm(a1 + a2, ln2w_ref[...], ln2b_ref[...])


# ---------------------------------------------------------------------------
# Wrapper
# ---------------------------------------------------------------------------
def block_forward(x, params, num_heads, *, attn_dtype=jnp.bfloat16):
    B, S, D = x.shape
    hd = D // num_heads
    d_ff = params["w1"].shape[1]

    # Fuse QKV weights to (D, 3D); ship matmul weights as bf16 (f32 accumulation
    # happens inside the kernel). Biases / LN params stay f32.
    wqkv = jnp.concatenate(
        [params["wq"], params["wk"], params["wv"]], axis=1).astype(jnp.bfloat16)
    bqkv = jnp.concatenate([params["bq"], params["bk"], params["bv"]], axis=1)
    wo = params["wo"].astype(jnp.bfloat16)
    w1 = params["w1"].astype(jnp.bfloat16)
    w2 = params["w2"].astype(jnp.bfloat16)

    out_shape = (
        jax.ShapeDtypeStruct((B, S, D), jnp.float32),
        jax.ShapeDtypeStruct((B, num_heads, S, S), attn_dtype),
    )

    const2 = lambda b: (0, 0)
    in_specs = [
        pl.BlockSpec((None, S, D), lambda b: (b, 0, 0)),   # x: streamed per batch
        pl.BlockSpec((D, 3 * D), const2),                  # weights: constant index
        pl.BlockSpec((1, 3 * D), const2),                  # -> DMA'd once, resident
        pl.BlockSpec((D, D), const2),
        pl.BlockSpec((1, D), const2),
        pl.BlockSpec((1, D), const2),
        pl.BlockSpec((1, D), const2),
        pl.BlockSpec((D, d_ff), const2),
        pl.BlockSpec((d_ff, D), const2),
        pl.BlockSpec((1, D), const2),
        pl.BlockSpec((1, D), const2),
    ]
    out_specs = [
        pl.BlockSpec((None, S, D), lambda b: (b, 0, 0)),
        pl.BlockSpec((None, num_heads, S, S), lambda b: (b, 0, 0, 0)),
    ]

    # --- explicit VMEM budget from actual tile footprint (+ margin) ---
    f32b, bf16b = 4, 2
    attn_b = jnp.dtype(attn_dtype).itemsize
    weight_bytes = (D * 3 * D + D * D + 2 * D * d_ff) * bf16b + 12 * D * f32b
    tile_bytes = (2 * S * D * f32b                       # x in / out tiles
                  + num_heads * S * S * attn_b           # attn tile
                  + S * 3 * D * f32b                     # qkv
                  + 3 * num_heads * S * S * f32b         # logits / e / w
                  + S * d_ff * f32b                      # ffn hidden
                  + 6 * S * D * f32b)                    # misc intermediates
    vmem_limit = int(min(128 * 1024 * 1024,
                         weight_bytes + 2 * tile_bytes + (16 << 20)))

    # --- cost estimate so XLA schedules around the custom call ---
    flops = (2 * B * S * D * 3 * D            # qkv projection
             + 4 * B * num_heads * S * S * hd  # qk^T + attn@v
             + 2 * B * S * D * D               # output projection
             + 4 * B * S * D * d_ff)           # ffn
    bytes_accessed = (B * S * D * f32b * 2 + weight_bytes
                      + B * num_heads * S * S * attn_b)
    cost = pl.CostEstimate(flops=flops,
                           transcendentals=B * num_heads * S * S + B * S * d_ff,
                           bytes_accessed=bytes_accessed)

    kernel = partial(_block_kernel, S, D, num_heads, hd)
    return pl.pallas_call(
        kernel,
        out_shape=out_shape,
        grid_spec=pltpu.PrefetchScalarGridSpec(
            num_scalar_prefetch=0,
            grid=(B,),                                    # batch: parallel grid axis
            in_specs=in_specs,
            out_specs=out_specs),
        compiler_params=pltpu.CompilerParams(
            dimension_semantics=("parallel",),            # shard batches over TCs (v7x)
            vmem_limit_bytes=vmem_limit),
        cost_estimate=cost,
    )(x, wqkv, bqkv, wo, params["bo"],
      params["ln1_w"], params["ln1_b"],
      w1, w2,
      params["ln2_w"], params["ln2_b"])


# ---------------------------------------------------------------------------
# Plain-JAX reference (mirrors the PyTorch Block forward, f32)
# ---------------------------------------------------------------------------
def block_reference(x, p, num_heads):
    B, S, D = x.shape
    hd = D // num_heads

    def split(t):
        return t.reshape(B, S, num_heads, hd).transpose(0, 2, 1, 3)

    q = split(x @ p["wq"] + p["bq"])
    k = split(x @ p["wk"] + p["bk"])
    v = split(x @ p["wv"] + p["bv"])

    logits = jnp.einsum("bhqd,bhkd->bhqk", q, k) / math.sqrt(hd)
    mask = jnp.triu(jnp.ones((S, S), jnp.float32), k=1) * -1e20
    attn = jax.nn.softmax(logits + mask, axis=-1)
    ctx = jnp.einsum("bhqk,bhkd->bhqd", attn, v)
    ctx = ctx.transpose(0, 2, 1, 3).reshape(B, S, D)
    attn_out = ctx @ p["wo"] + p["bo"]

    def ln(t, w, b, eps=1e-5):
        m = jnp.mean(t, axis=-1, keepdims=True)
        var = jnp.mean((t - m) ** 2, axis=-1, keepdims=True)
        return (t - m) / jnp.sqrt(var + eps) * w + b

    a1 = ln(x + attn_out, p["ln1_w"], p["ln1_b"])
    h1 = jax.nn.gelu(a1 @ p["w1"], approximate=False)
    a2 = h1 @ p["w2"]
    a2 = ln(a1 + a2, p["ln2_w"], p["ln2_b"])
    return a2, attn


# ---------------------------------------------------------------------------
# Main
# ---------------------------------------------------------------------------
if __name__ == "__main__":
    B, S, D, H, MULT = 2, 8, 32, 4, 4
    d_ff = MULT * D

    key = jax.random.PRNGKey(0)
    ks = jax.random.split(key, 12)
    scale = 0.02

    params = {
        "wq": jax.random.normal(ks[0], (D, D), jnp.float32) * scale,
        "bq": jax.random.normal(ks[1], (1, D), jnp.float32) * scale,
        "wk": jax.random.normal(ks[2], (D, D), jnp.float32) * scale,
        "bk": jax.random.normal(ks[3], (1, D), jnp.float32) * scale,
        "wv": jax.random.normal(ks[4], (D, D), jnp.float32) * scale,
        "bv": jax.random.normal(ks[5], (1, D), jnp.float32) * scale,
        "wo": jax.random.normal(ks[6], (D, D), jnp.float32) * scale,
        "bo": jax.random.normal(ks[7], (1, D), jnp.float32) * scale,
        "ln1_w": jnp.ones((1, D), jnp.float32),     # LayerNorm.reset_parameters
        "ln1_b": jnp.zeros((1, D), jnp.float32),
        "w1": jax.random.normal(ks[8], (D, d_ff), jnp.float32) * scale,
        "w2": jax.random.normal(ks[9], (d_ff, D), jnp.float32) * scale,
        "ln2_w": jnp.ones((1, D), jnp.float32),
        "ln2_b": jnp.zeros((1, D), jnp.float32),
    }

    x = jax.random.normal(ks[10], (B, S, D), jnp.float32)

    out, attn = block_forward(x, params, num_heads=H)
    out = jax.block_until_ready(out)
    attn = jax.block_until_ready(attn)

    ref_out, ref_attn = block_reference(x, params, num_heads=H)
    assert out.shape == (B, S, D) and attn.shape == (B, H, S, S)
    assert jnp.allclose(out, ref_out, atol=5e-2, rtol=5e-2)
    assert jnp.allclose(attn.astype(jnp.float32), ref_attn, atol=5e-2, rtol=5e-2)

    print("KERNEL_OK")
</pallas_src>

<mosaic_0001>
module attributes {stable_mosaic.version = 11 : i64} {
  func.func @_block_kernel(%arg0: i32, %arg1: memref<1x8x32xf32, #tpu.memory_space<vmem>>, %arg2: memref<32x96xbf16, #tpu.memory_space<vmem>>, %arg3: memref<1x96xf32, #tpu.memory_space<vmem>>, %arg4: memref<32x32xbf16, #tpu.memory_space<vmem>>, %arg5: memref<1x32xf32, #tpu.memory_space<vmem>>, %arg6: memref<1x32xf32, #tpu.memory_space<vmem>>, %arg7: memref<1x32xf32, #tpu.memory_space<vmem>>, %arg8: memref<32x128xbf16, #tpu.memory_space<vmem>>, %arg9: memref<128x32xbf16, #tpu.memory_space<vmem>>, %arg10: memref<1x32xf32, #tpu.memory_space<vmem>>, %arg11: memref<1x32xf32, #tpu.memory_space<vmem>>, %arg12: memref<1x8x32xf32, #tpu.memory_space<vmem>>, %arg13: memref<1x4x8x8xbf16, #tpu.memory_space<vmem>>) attributes {dimension_semantics = [#tpu.dimension_semantics<parallel>], iteration_bounds = array<i64: 2>, scalar_prefetch = 0 : i64, scratch_operands = 0 : i64, tpu.core_type = #tpu.core_type<tc>, window_params = [{transform_indices = @transform_0, window_bounds = array<i64: 1, 8, 32>}, {pipeline_mode = #tpu.pipeline_mode<synchronous>, transform_indices = @transform_1, window_bounds = array<i64: 32, 96>}, {pipeline_mode = #tpu.pipeline_mode<synchronous>, transform_indices = @transform_2, window_bounds = array<i64: 1, 96>}, {pipeline_mode = #tpu.pipeline_mode<synchronous>, transform_indices = @transform_3, window_bounds = array<i64: 32, 32>}, {pipeline_mode = #tpu.pipeline_mode<synchronous>, transform_indices = @transform_4, window_bounds = array<i64: 1, 32>}, {pipeline_mode = #tpu.pipeline_mode<synchronous>, transform_indices = @transform_5, window_bounds = array<i64: 1, 32>}, {pipeline_mode = #tpu.pipeline_mode<synchronous>, transform_indices = @transform_6, window_bounds = array<i64: 1, 32>}, {pipeline_mode = #tpu.pipeline_mode<synchronous>, transform_indices = @transform_7, window_bounds = array<i64: 32, 128>}, {pipeline_mode = #tpu.pipeline_mode<synchronous>, transform_indices = @transform_8, window_bounds = array<i64: 128, 32>}, {pipeline_mode = #tpu.pipeline_mode<synchronous>, transform_indices = @transform_9, window_bounds = array<i64: 1, 32>}, {pipeline_mode = #tpu.pipeline_mode<synchronous>, transform_indices = @transform_10, window_bounds = array<i64: 1, 32>}, {transform_indices = @transform_11, window_bounds = array<i64: 1, 8, 32>}, {transform_indices = @transform_12, window_bounds = array<i64: 1, 4, 8, 8>}]} {
    %c0 = arith.constant 0 : index
    %c0_0 = arith.constant 0 : index
    %c0_1 = arith.constant 0 : index
    %0 = vector.load %arg1[%c0, %c0_0, %c0_1] : memref<1x8x32xf32, #tpu.memory_space<vmem>>, vector<1x8x32xf32>
    %1 = vector.shape_cast %0 : vector<1x8x32xf32> to vector<8x32xf32>
    %2 = arith.truncf %1 : vector<8x32xf32> to vector<8x32xbf16>
    %c0_2 = arith.constant 0 : index
    %c0_3 = arith.constant 0 : index
    %3 = vector.load %arg2[%c0_2, %c0_3] : memref<32x96xbf16, #tpu.memory_space<vmem>>, vector<32x96xbf16>
    %cst = arith.constant dense<0.000000e+00> : vector<8x96xf32>
    %4 = tpu.matmul %2, %3, %cst {dimension_numbers = #tpu.dot_dimension_numbers<[1], [0], [0], [1], [0, 0, 1, 1], [], []>} : vector<8x32xbf16>, vector<32x96xbf16>, vector<8x96xf32> -> vector<8x96xf32>
    %c0_4 = arith.constant 0 : index
    %c0_5 = arith.constant 0 : index
    %5 = vector.load %arg3[%c0_4, %c0_5] : memref<1x96xf32, #tpu.memory_space<vmem>>, vector<1x96xf32>
    %6 = vector.broadcast %5 : vector<1x96xf32> to vector<8x96xf32>
    %7 = arith.addf %4, %6 : vector<8x96xf32>
    %8 = vector.shape_cast %7 : vector<8x96xf32> to vector<8x12x8xf32>
    %9 = tpu.transpose %8, [1, 0, 2] : vector<8x12x8xf32> -> vector<12x8x8xf32>
    %10 = vector.extract_strided_slice %9 {offsets = [0, 0, 0], sizes = [4, 8, 8], strides = [1, 1, 1]} : vector<12x8x8xf32> to vector<4x8x8xf32>
    %11 = arith.truncf %10 : vector<4x8x8xf32> to vector<4x8x8xbf16>
    %12 = vector.extract_strided_slice %9 {offsets = [4, 0, 0], sizes = [4, 8, 8], strides = [1, 1, 1]} : vector<12x8x8xf32> to vector<4x8x8xf32>
    %13 = arith.truncf %12 : vector<4x8x8xf32> to vector<4x8x8xbf16>
    %14 = vector.extract_strided_slice %9 {offsets = [8, 0, 0], sizes = [4, 8, 8], strides = [1, 1, 1]} : vector<12x8x8xf32> to vector<4x8x8xf32>
    %15 = arith.truncf %14 : vector<4x8x8xf32> to vector<4x8x8xbf16>
    %16 = tpu.iota {dimensions = array<i32: 0>} : vector<8x8xi32>
    %17 = tpu.iota {dimensions = array<i32: 1>} : vector<8x8xi32>
    %18 = arith.cmpi sle, %17, %16 : vector<8x8xi32>
    %19 = vector.shape_cast %18 : vector<8x8xi1> to vector<1x8x8xi1>
    "tpu.trace_start"() <{level = 10 : i32, message = "hqd,hkd->hqk"}> : () -> ()
    %cst_6 = arith.constant dense<0.000000e+00> : vector<4x8x8xf32>
    %20 = tpu.matmul %11, %13, %cst_6 {dimension_numbers = #tpu.dot_dimension_numbers<[2], [2], [1], [1], [0, 0, 0, 1, 1, 1], [0], [0]>} : vector<4x8x8xbf16>, vector<4x8x8xbf16>, vector<4x8x8xf32> -> vector<4x8x8xf32>
    "tpu.trace_stop"() : () -> ()
    %cst_7 = arith.constant 0.353553385 : f32
    %21 = vector.broadcast %cst_7 : f32 to vector<4x8x8xf32>
    %22 = arith.mulf %20, %21 : vector<4x8x8xf32>
    %cst_8 = arith.constant -1.000000e+20 : f32
    %23 = vector.shape_cast %19 : vector<1x8x8xi1> to vector<1x8x8xi1>
    %24 = vector.broadcast %23 : vector<1x8x8xi1> to vector<4x8x8xi1>
    %25 = vector.broadcast %cst_8 : f32 to vector<4x8x8xf32>
    %26 = arith.select %24, %22, %25 : vector<4x8x8xi1>, vector<4x8x8xf32>
    %cst_9 = arith.constant dense<0xFF800000> : vector<4x8xf32>
    %27 = vector.multi_reduction <maximumf>, %26, %cst_9 [2] : vector<4x8x8xf32> to vector<4x8xf32>
    %28 = vector.shape_cast %27 : vector<4x8xf32> to vector<4x8x1xf32>
    %29 = vector.broadcast %28 : vector<4x8x1xf32> to vector<4x8x8xf32>
    %30 = arith.subf %26, %29 : vector<4x8x8xf32>
    %31 = math.exp %30 : vector<4x8x8xf32>
    %cst_10 = arith.constant dense<0.000000e+00> : vector<4x8xf32>
    %32 = vector.multi_reduction <add>, %31, %cst_10 [2] : vector<4x8x8xf32> to vector<4x8xf32>
    %33 = vector.shape_cast %32 : vector<4x8xf32> to vector<4x8x1xf32>
    %34 = tpu.reciprocal %33 {approx = true} : vector<4x8x1xf32> -> vector<4x8x1xf32>
    %35 = vector.broadcast %34 : vector<4x8x1xf32> to vector<4x8x8xf32>
    %36 = arith.mulf %31, %35 : vector<4x8x8xf32>
    %37 = arith.truncf %36 : vector<4x8x8xf32> to vector<4x8x8xbf16>
    %c0_11 = arith.constant 0 : index
    %c0_12 = arith.constant 0 : index
    %c0_13 = arith.constant 0 : index
    %c0_14 = arith.constant 0 : index
    %38 = vector.load %arg13[%c0_11, %c0_12, %c0_13, %c0_14] : memref<1x4x8x8xbf16, #tpu.memory_space<vmem>>, vector<1x4x8x8xbf16>
    %39 = vector.shape_cast %38 : vector<1x4x8x8xbf16> to vector<4x8x8xbf16>
    %40 = vector.shape_cast %37 : vector<4x8x8xbf16> to vector<1x4x8x8xbf16>
    tpu.vector_store %arg13[%c0_11, %c0_12, %c0_13, %c0_14], %40 {strides = array<i32>} : memref<1x4x8x8xbf16, #tpu.memory_space<vmem>>, vector<1x4x8x8xbf16>,
    %41 = arith.truncf %36 : vector<4x8x8xf32> to vector<4x8x8xbf16>
    "tpu.trace_start"() <{level = 10 : i32, message = "hqk,hkd->hqd"}> : () -> ()
    %cst_15 = arith.constant dense<0.000000e+00> : vector<4x8x8xf32>
    %42 = tpu.matmul %41, %15, %cst_15 {dimension_numbers = #tpu.dot_dimension_numbers<[2], [1], [1], [2], [0, 0, 0, 1, 1, 2], [0], [0]>} : vector<4x8x8xbf16>, vector<4x8x8xbf16>, vector<4x8x8xf32> -> vector<4x8x8xf32>
    "tpu.trace_stop"() : () -> ()
    %43 = tpu.transpose %42, [1, 0, 2] : vector<4x8x8xf32> -> vector<8x4x8xf32>
    %44 = vector.shape_cast %43 : vector<8x4x8xf32> to vector<8x32xf32>
    %45 = arith.truncf %44 : vector<8x32xf32> to vector<8x32xbf16>
    %c0_16 = arith.constant 0 : index
    %c0_17 = arith.constant 0 : index
    %46 = vector.load %arg4[%c0_16, %c0_17] : memref<32x32xbf16, #tpu.memory_space<vmem>>, vector<32x32xbf16>
    %cst_18 = arith.constant dense<0.000000e+00> : vector<8x32xf32>
    %47 = tpu.matmul %45, %46, %cst_18 {dimension_numbers = #tpu.dot_dimension_numbers<[1], [0], [0], [1], [0, 0, 1, 1], [], []>} : vector<8x32xbf16>, vector<32x32xbf16>, vector<8x32xf32> -> vector<8x32xf32>
    %c0_19 = arith.constant 0 : index
    %c0_20 = arith.constant 0 : index
    %48 = vector.load %arg5[%c0_19, %c0_20] : memref<1x32xf32, #tpu.memory_space<vmem>>, vector<1x32xf32>
    %49 = vector.broadcast %48 : vector<1x32xf32> to vector<8x32xf32>
    %50 = arith.addf %47, %49 : vector<8x32xf32>
    %51 = arith.addf %1, %50 : vector<8x32xf32>
    %c0_21 = arith.constant 0 : index
    %c0_22 = arith.constant 0 : index
    %52 = vector.load %arg6[%c0_21, %c0_22] : memref<1x32xf32, #tpu.memory_space<vmem>>, vector<1x32xf32>
    %c0_23 = arith.constant 0 : index
    %c0_24 = arith.constant 0 : index
    %53 = vector.load %arg7[%c0_23, %c0_24] : memref<1x32xf32, #tpu.memory_space<vmem>>, vector<1x32xf32>
    %cst_25 = arith.constant dense<0.000000e+00> : vector<8xf32>
    %54 = vector.multi_reduction <add>, %51, %cst_25 [1] : vector<8x32xf32> to vector<8xf32>
    %55 = vector.shape_cast %54 : vector<8xf32> to vector<8x1xf32>
    %cst_26 = arith.constant 3.200000e+01 : f32
    %56 = vector.broadcast %cst_26 : f32 to vector<8x1xf32>
    %57 = arith.divf %55, %56 : vector<8x1xf32>
    %58 = vector.broadcast %57 : vector<8x1xf32> to vector<8x32xf32>
    %59 = arith.subf %51, %58 : vector<8x32xf32>
    %60 = arith.mulf %59, %59 : vector<8x32xf32>
    %cst_27 = arith.constant dense<0.000000e+00> : vector<8xf32>
    %61 = vector.multi_reduction <add>, %60, %cst_27 [1] : vector<8x32xf32> to vector<8xf32>
    %62 = vector.shape_cast %61 : vector<8xf32> to vector<8x1xf32>
    %cst_28 = arith.constant 3.200000e+01 : f32
    %63 = vector.broadcast %cst_28 : f32 to vector<8x1xf32>
    %64 = arith.divf %62, %63 : vector<8x1xf32>
    %65 = vector.broadcast %57 : vector<8x1xf32> to vector<8x32xf32>
    %66 = arith.subf %51, %65 : vector<8x32xf32>
    %cst_29 = arith.constant 9.99999974E-6 : f32
    %67 = vector.broadcast %cst_29 : f32 to vector<8x1xf32>
    %68 = arith.addf %64, %67 : vector<8x1xf32>
    %69 = math.rsqrt %68 : vector<8x1xf32>
    %70 = vector.broadcast %69 : vector<8x1xf32> to vector<8x32xf32>
    %71 = arith.mulf %66, %70 : vector<8x32xf32>
    %72 = vector.broadcast %52 : vector<1x32xf32> to vector<8x32xf32>
    %73 = arith.mulf %71, %72 : vector<8x32xf32>
    %74 = vector.broadcast %53 : vector<1x32xf32> to vector<8x32xf32>
    %75 = arith.addf %73, %74 : vector<8x32xf32>
    %76 = arith.truncf %75 : vector<8x32xf32> to vector<8x32xbf16>
    %c0_30 = arith.constant 0 : index
    %c0_31 = arith.constant 0 : index
    %77 = vector.load %arg8[%c0_30, %c0_31] : memref<32x128xbf16, #tpu.memory_space<vmem>>, vector<32x128xbf16>
    %cst_32 = arith.constant dense<0.000000e+00> : vector<8x128xf32>
    %78 = tpu.matmul %76, %77, %cst_32 {dimension_numbers = #tpu.dot_dimension_numbers<[1], [0], [0], [1], [0, 0, 1, 1], [], []>} : vector<8x32xbf16>, vector<32x128xbf16>, vector<8x128xf32> -> vector<8x128xf32>
    %cst_33 = arith.constant 5.000000e-01 : f32
    %79 = vector.broadcast %cst_33 : f32 to vector<8x128xf32>
    %80 = arith.mulf %79, %78 : vector<8x128xf32>
    %cst_34 = arith.constant 0.707106769 : f32
    %81 = vector.broadcast %cst_34 : f32 to vector<8x128xf32>
    %82 = arith.mulf %78, %81 : vector<8x128xf32>
    %83 = math.erf %82 : vector<8x128xf32>
    %cst_35 = arith.constant 1.000000e+00 : f32
    %84 = vector.broadcast %cst_35 : f32 to vector<8x128xf32>
    %85 = arith.addf %84, %83 : vector<8x128xf32>
    %86 = arith.mulf %80, %85 : vector<8x128xf32>
    %87 = arith.truncf %86 : vector<8x128xf32> to vector<8x128xbf16>
    %c0_36 = arith.constant 0 : index
    %c0_37 = arith.constant 0 : index
    %88 = vector.load %arg9[%c0_36, %c0_37] : memref<128x32xbf16, #tpu.memory_space<vmem>>, vector<128x32xbf16>
    %cst_38 = arith.constant dense<0.000000e+00> : vector<8x32xf32>
    %89 = tpu.matmul %87, %88, %cst_38 {dimension_numbers = #tpu.dot_dimension_numbers<[1], [0], [0], [1], [0, 0, 1, 1], [], []>} : vector<8x128xbf16>, vector<128x32xbf16>, vector<8x32xf32> -> vector<8x32xf32>
    %90 = arith.addf %75, %89 : vector<8x32xf32>
    %c0_39 = arith.constant 0 : index
    %c0_40 = arith.constant 0 : index
    %91 = vector.load %arg10[%c0_39, %c0_40] : memref<1x32xf32, #tpu.memory_space<vmem>>, vector<1x32xf32>
    %c0_41 = arith.constant 0 : index
    %c0_42 = arith.constant 0 : index
    %92 = vector.load %arg11[%c0_41, %c0_42] : memref<1x32xf32, #tpu.memory_space<vmem>>, vector<1x32xf32>
    %cst_43 = arith.constant dense<0.000000e+00> : vector<8xf32>
    %93 = vector.multi_reduction <add>, %90, %cst_43 [1] : vector<8x32xf32> to vector<8xf32>
    %94 = vector.shape_cast %93 : vector<8xf32> to vector<8x1xf32>
    %cst_44 = arith.constant 3.200000e+01 : f32
    %95 = vector.broadcast %cst_44 : f32 to vector<8x1xf32>
    %96 = arith.divf %94, %95 : vector<8x1xf32>
    %97 = vector.broadcast %96 : vector<8x1xf32> to vector<8x32xf32>
    %98 = arith.subf %90, %97 : vector<8x32xf32>
    %99 = arith.mulf %98, %98 : vector<8x32xf32>
    %cst_45 = arith.constant dense<0.000000e+00> : vector<8xf32>
    %100 = vector.multi_reduction <add>, %99, %cst_45 [1] : vector<8x32xf32> to vector<8xf32>
    %101 = vector.shape_cast %100 : vector<8xf32> to vector<8x1xf32>
    %cst_46 = arith.constant 3.200000e+01 : f32
    %102 = vector.broadcast %cst_46 : f32 to vector<8x1xf32>
    %103 = arith.divf %101, %102 : vector<8x1xf32>
    %104 = vector.broadcast %96 : vector<8x1xf32> to vector<8x32xf32>
    %105 = arith.subf %90, %104 : vector<8x32xf32>
    %cst_47 = arith.constant 9.99999974E-6 : f32
    %106 = vector.broadcast %cst_47 : f32 to vector<8x1xf32>
    %107 = arith.addf %103, %106 : vector<8x1xf32>
    %108 = math.rsqrt %107 : vector<8x1xf32>
    %109 = vector.broadcast %108 : vector<8x1xf32> to vector<8x32xf32>
    %110 = arith.mulf %105, %109 : vector<8x32xf32>
    %111 = vector.broadcast %91 : vector<1x32xf32> to vector<8x32xf32>
    %112 = arith.mulf %110, %111 : vector<8x32xf32>
    %113 = vector.broadcast %92 : vector<1x32xf32> to vector<8x32xf32>
    %114 = arith.addf %112, %113 : vector<8x32xf32>
    %c0_48 = arith.constant 0 : index
    %c0_49 = arith.constant 0 : index
    %c0_50 = arith.constant 0 : index
    %115 = vector.load %arg12[%c0_48, %c0_49, %c0_50] : memref<1x8x32xf32, #tpu.memory_space<vmem>>, vector<1x8x32xf32>
    %116 = vector.shape_cast %115 : vector<1x8x32xf32> to vector<8x32xf32>
    %117 = vector.shape_cast %114 : vector<8x32xf32> to vector<1x8x32xf32>
    tpu.vector_store %arg12[%c0_48, %c0_49, %c0_50], %117 {strides = array<i32>} : memref<1x8x32xf32, #tpu.memory_space<vmem>>, vector<1x8x32xf32>,
    return
  }
  func.func @transform_0(%arg0: i32) -> (i32, i32, i32) {
    %c0_i32 = arith.constant 0 : i32
    %c0_i32_0 = arith.constant 0 : i32
    %c0_i32_1 = arith.constant 0 : i32
    return %arg0, %c0_i32, %c0_i32_0 : i32, i32, i32
  }
  func.func @transform_1(%arg0: i32) -> (i32, i32) {
    %c0_i32 = arith.constant 0 : i32
    %c0_i32_0 = arith.constant 0 : i32
    %c0_i32_1 = arith.constant 0 : i32
    return %c0_i32, %c0_i32_0 : i32, i32
  }
  func.func @transform_2(%arg0: i32) -> (i32, i32) {
    %c0_i32 = arith.constant 0 : i32
    %c0_i32_0 = arith.constant 0 : i32
    %c0_i32_1 = arith.constant 0 : i32
    return %c0_i32, %c0_i32_0 : i32, i32
  }
  func.func @transform_3(%arg0: i32) -> (i32, i32) {
    %c0_i32 = arith.constant 0 : i32
    %c0_i32_0 = arith.constant 0 : i32
    %c0_i32_1 = arith.constant 0 : i32
    return %c0_i32, %c0_i32_0 : i32, i32
  }
  func.func @transform_4(%arg0: i32) -> (i32, i32) {
    %c0_i32 = arith.constant 0 : i32
    %c0_i32_0 = arith.constant 0 : i32
    %c0_i32_1 = arith.constant 0 : i32
    return %c0_i32, %c0_i32_0 : i32, i32
  }
  func.func @transform_5(%arg0: i32) -> (i32, i32) {
    %c0_i32 = arith.constant 0 : i32
    %c0_i32_0 = arith.constant 0 : i32
    %c0_i32_1 = arith.constant 0 : i32
    return %c0_i32, %c0_i32_0 : i32, i32
  }
  func.func @transform_6(%arg0: i32) -> (i32, i32) {
    %c0_i32 = arith.constant 0 : i32
    %c0_i32_0 = arith.constant 0 : i32
    %c0_i32_1 = arith.constant 0 : i32
    return %c0_i32, %c0_i32_0 : i32, i32
  }
  func.func @transform_7(%arg0: i32) -> (i32, i32) {
    %c0_i32 = arith.constant 0 : i32
    %c0_i32_0 = arith.constant 0 : i32
    %c0_i32_1 = arith.constant 0 : i32
    return %c0_i32, %c0_i32_0 : i32, i32
  }
  func.func @transform_8(%arg0: i32) -> (i32, i32) {
    %c0_i32 = arith.constant 0 : i32
    %c0_i32_0 = arith.constant 0 : i32
    %c0_i32_1 = arith.constant 0 : i32
    return %c0_i32, %c0_i32_0 : i32, i32
  }
  func.func @transform_9(%arg0: i32) -> (i32, i32) {
    %c0_i32 = arith.constant 0 : i32
    %c0_i32_0 = arith.constant 0 : i32
    %c0_i32_1 = arith.constant 0 : i32
    return %c0_i32, %c0_i32_0 : i32, i32
  }
  func.func @transform_10(%arg0: i32) -> (i32, i32) {
    %c0_i32 = arith.constant 0 : i32
    %c0_i32_0 = arith.constant 0 : i32
    %c0_i32_1 = arith.constant 0 : i32
    return %c0_i32, %c0_i32_0 : i32, i32
  }
  func.func @transform_11(%arg0: i32) -> (i32, i32, i32) {
    %c0_i32 = arith.constant 0 : i32
    %c0_i32_0 = arith.constant 0 : i32
    %c0_i32_1 = arith.constant 0 : i32
    return %arg0, %c0_i32, %c0_i32_0 : i32, i32, i32
  }
  func.func @transform_12(%arg0: i32) -> (i32, i32, i32, i32) {
    %c0_i32 = arith.constant 0 : i32
    %c0_i32_0 = arith.constant 0 : i32
    %c0_i32_1 = arith.constant 0 : i32
    %c0_i32_2 = arith.constant 0 : i32
    return %arg0, %c0_i32, %c0_i32_0, %c0_i32_1 : i32, i32, i32, i32
  }
}

</mosaic_0001>

<llo_original>
// kernel: tpu_custom_call.1
$region0: #{tpu_custom_call.1}
  #allocation0 [shape = 'u32[]', space=smem, size = 0x4, offset = 0x4, fixed_abs, tag = 'smem constant byte address 0x4 - core index']
  #allocation1 [shape = 'u32[144,128]{1,0:T(1,128)}', space=vmem, size = 0x12000, scoped, tag = 'internal scratch']
  %s0 = inlined_call_operand.vmem [shape: f32[2,8,32], index: 0, kind: input, shape index: {}]
  %s1 = inlined_call_operand.vmem [shape: bf16[32,96], index: 1, kind: input, shape index: {}]
  %s2 = inlined_call_operand.vmem [shape: f32[1,96], index: 2, kind: input, shape index: {}]
  %s3 = inlined_call_operand.vmem [shape: bf16[32,32], index: 3, kind: input, shape index: {}]
  %s4 = inlined_call_operand.vmem [shape: f32[1,32], index: 4, kind: input, shape index: {}]
  %s5 = inlined_call_operand.vmem [shape: f32[1,32], index: 5, kind: input, shape index: {}]
  %s6 = inlined_call_operand.vmem [shape: f32[1,32], index: 6, kind: input, shape index: {}]
  %s7 = inlined_call_operand.vmem [shape: bf16[32,128], index: 7, kind: input, shape index: {}]
  %s8 = inlined_call_operand.vmem [shape: bf16[128,32], index: 8, kind: input, shape index: {}]
  %s9 = inlined_call_operand.vmem [shape: f32[1,32], index: 9, kind: input, shape index: {}]
  %s10 = inlined_call_operand.vmem [shape: f32[1,32], index: 10, kind: input, shape index: {}]
  %s11 = inlined_call_operand.hbm [shape: f32[2,8,32], index: 11, kind: output, shape index: {0}]
  %s12 = inlined_call_operand.hbm [shape: bf16[2,4,8,8], index: 12, kind: output, shape index: {1}]
  %13 = xla_tuple %s11, %s12
  %s14 = sld [smem:[#allocation0]]
  $region85: #{tpu_custom_call.1} parent=0
    _
  %s16 = ssub.s32 1, %s14
  %s17 = scalar_select 0, %s16, %s14
  $region1: #{tpu_custom_call.1} parent=0
    #allocation2 [shape = 'u8[8192]{0}', space=vmem, size = 0x2000, scoped, tag = 'output window, operand 0']
    #allocation3 [shape = 's32[2]{0}', space=sflag, size = 0x8, scoped, tag = 'scoped memory for tpu_custom_call.1']
    #allocation4 [shape = 'u8[16384]{0}', space=vmem, size = 0x4000, scoped, tag = 'output window, operand 1']
    #allocation5 [shape = 's32[2]{0}', space=sflag, size = 0x8, scoped, tag = 'scoped memory for tpu_custom_call.1']
    %18 = vsyncpa [#allocation3], 0
    %s19 = scalar_lea.sflag [#allocation3], 1
    %20 = vsyncpa %s19, 0
    %21 = vsyncpa [#allocation5], 0
    %s22 = scalar_lea.sflag [#allocation5], 1
    %23 = vsyncpa %s22, 0
    loop: start=0, step=1, limit=4
    $region2: #{tpu_custom_call.1} parent=1 // loop_pre_header
      _
    $region3: #{tpu_custom_call.1} parent=1 // loop_header
      %s25 = sphi 0, %s29
      %p26 = scmp.ge.s32.totalorder %s25, 4
      %s35 = sphi 0, %s37
      %s38 = sphi 0, %s35
      %s39 = sphi 0, %s38
      %s55 = sphi 0, %s39
      %s59 = sphi 0, %s59
      %s61 = sphi 0, %s59
      %s62 = sphi 0, %s61
      %s76 = sphi 0, %s62
      %s80 = sphi 0, %s80
      %s82 = sphi 0, %s80
      %s83 = sphi 0, %s82
      %s97 = sphi 0, %s83
      %s101 = sphi 0, %s101
      %s103 = sphi 0, %s101
      %s104 = sphi 0, %s103
      %s118 = sphi 0, %s104
      %s122 = sphi 0, %s122
      %s124 = sphi 0, %s122
      %s125 = sphi 0, %s124
      %s139 = sphi 0, %s125
      %s143 = sphi 0, %s143
      %s145 = sphi 0, %s143
      %s146 = sphi 0, %s145
      %s160 = sphi 0, %s146
      %s164 = sphi 0, %s164
      %s166 = sphi 0, %s164
      %s167 = sphi 0, %s166
      %s181 = sphi 0, %s167
      %s185 = sphi 0, %s185
      %s187 = sphi 0, %s185
      %s188 = sphi 0, %s187
      %s202 = sphi 0, %s188
      %s206 = sphi 0, %s206
      %s208 = sphi 0, %s206
      %s209 = sphi 0, %s208
      %s223 = sphi 0, %s209
      %s227 = sphi 0, %s227
      %s229 = sphi 0, %s227
      %s230 = sphi 0, %s229
      %s244 = sphi 0, %s230
      %s248 = sphi 0, %s248
      %s250 = sphi 0, %s248
      %s251 = sphi 0, %s250
      %s265 = sphi 0, %s251
      %s271 = sphi 0, %s273
      %s274 = sphi 0, %s271
      %s275 = sphi 0, %s274
      %s291 = sphi 0, %s275
      %s297 = sphi 0, %s299
      %s300 = sphi 0, %s297
      %s301 = sphi 0, %s300
      %s317 = sphi 0, %s301
    $region4: #{tpu_custom_call.1} parent=1 // loop_header_branch
      %28 = sbr.rel (%p26) target = $region8
    $region5: #{tpu_custom_call.1} parent=1 // loop_body
      %s30 = ssub.s32 %s25, 1
      %s31 = ssub.s32 %s25, 2
      %s32 = sadd.s32 %s25, 1
      %s33 = ssub.s32 %s25, %s32
      %p34 = scmp.eq.s32.totalorder %s33, 0
      %s36 = sadd.s32 %s35, 1
      %s37 = scalar_select %p34, %s35, %s36
      %p40 = pneg %p34
      %p41 = scmp.eq.s32.totalorder %s25, 1
      %p42 = por %p40, %p41
      %p43 = scmp.ne.s32.totalorder %s35, %s38
      %p44 = scmp.eq.s32.totalorder %s25, 0
      %p45 = por %p43, %p44
      %p46 = scmp.ne.s32.totalorder %s35, %s38
      %p47 = scmp.eq.s32.totalorder %s30, 1
      %p48 = por %p46, %p47
      %p49 = scmp.ne.s32.totalorder %s38, %s39
      %p50 = scmp.eq.s32.totalorder %s30, 0
      %p51 = por %p49, %p50
      %p52 = scmp.ne.s32.totalorder %s38, %s39
      %p53 = scmp.eq.s32.totalorder %s31, 1
      %p54 = por %p52, %p53
      %p56 = scmp.ne.s32.totalorder %s39, %s55
      %p57 = scmp.eq.s32.totalorder %s31, 0
      %p58 = por %p56, %p57
      %s60 = sadd.s32 %s59, 1
      %p63 = scmp.eq.s32.totalorder %s25, 1
      %p64 = scmp.ne.s32.totalorder %s59, %s61
      %p65 = scmp.eq.s32.totalorder %s25, 0
      %p66 = por %p64, %p65
      %p67 = scmp.ne.s32.totalorder %s59, %s61
      %p68 = scmp.eq.s32.totalorder %s30, 1
      %p69 = por %p67, %p68
      %p70 = scmp.ne.s32.totalorder %s61, %s62
      %p71 = scmp.eq.s32.totalorder %s30, 0
      %p72 = por %p70, %p71
      %p73 = scmp.ne.s32.totalorder %s61, %s62
      %p74 = scmp.eq.s32.totalorder %s31, 1
      %p75 = por %p73, %p74
      %p77 = scmp.ne.s32.totalorder %s62, %s76
      %p78 = scmp.eq.s32.totalorder %s31, 0
      %p79 = por %p77, %p78
      %s81 = sadd.s32 %s80, 1
      %p84 = scmp.eq.s32.totalorder %s25, 1
      %p85 = scmp.ne.s32.totalorder %s80, %s82
      %p86 = scmp.eq.s32.totalorder %s25, 0
      %p87 = por %p85, %p86
      %p88 = scmp.ne.s32.totalorder %s80, %s82
      %p89 = scmp.eq.s32.totalorder %s30, 1
      %p90 = por %p88, %p89
      %p91 = scmp.ne.s32.totalorder %s82, %s83
      %p92 = scmp.eq.s32.totalorder %s30, 0
      %p93 = por %p91, %p92
      %p94 = scmp.ne.s32.totalorder %s82, %s83
      %p95 = scmp.eq.s32.totalorder %s31, 1
      %p96 = por %p94, %p95
      %p98 = scmp.ne.s32.totalorder %s83, %s97
      %p99 = scmp.eq.s32.totalorder %s31, 0
      %p100 = por %p98, %p99
      %s102 = sadd.s32 %s101, 1
      %p105 = scmp.eq.s32.totalorder %s25, 1
      %p106 = scmp.ne.s32.totalorder %s101, %s103
      %p107 = scmp.eq.s32.totalorder %s25, 0
      %p108 = por %p106, %p107
      %p109 = scmp.ne.s32.totalorder %s101, %s103
      %p110 = scmp.eq.s32.totalorder %s30, 1
      %p111 = por %p109, %p110
      %p112 = scmp.ne.s32.totalorder %s103, %s104
      %p113 = scmp.eq.s32.totalorder %s30, 0
      %p114 = por %p112, %p113
      %p115 = scmp.ne.s32.totalorder %s103, %s104
      %p116 = scmp.eq.s32.totalorder %s31, 1
      %p117 = por %p115, %p116
      %p119 = scmp.ne.s32.totalorder %s104, %s118
      %p120 = scmp.eq.s32.totalorder %s31, 0
      %p121 = por %p119, %p120
      %s123 = sadd.s32 %s122, 1
      %p126 = scmp.eq.s32.totalorder %s25, 1
      %p127 = scmp.ne.s32.totalorder %s122, %s124
      %p128 = scmp.eq.s32.totalorder %s25, 0
      %p129 = por %p127, %p128
      %p130 = scmp.ne.s32.totalorder %s122, %s124
      %p131 = scmp.eq.s32.totalorder %s30, 1
      %p132 = por %p130, %p131
      %p133 = scmp.ne.s32.totalorder %s124, %s125
      %p134 = scmp.eq.s32.totalorder %s30, 0
      %p135 = por %p133, %p134
      %p136 = scmp.ne.s32.totalorder %s124, %s125
      %p137 = scmp.eq.s32.totalorder %s31, 1
      %p138 = por %p136, %p137
      %p140 = scmp.ne.s32.totalorder %s125, %s139
      %p141 = scmp.eq.s32.totalorder %s31, 0
      %p142 = por %p140, %p141
      %s144 = sadd.s32 %s143, 1
      %p147 = scmp.eq.s32.totalorder %s25, 1
      %p148 = scmp.ne.s32.totalorder %s143, %s145
      %p149 = scmp.eq.s32.totalorder %s25, 0
      %p150 = por %p148, %p149
      %p151 = scmp.ne.s32.totalorder %s143, %s145
      %p152 = scmp.eq.s32.totalorder %s30, 1
      %p153 = por %p151, %p152
      %p154 = scmp.ne.s32.totalorder %s145, %s146
      %p155 = scmp.eq.s32.totalorder %s30, 0
      %p156 = por %p154, %p155
      %p157 = scmp.ne.s32.totalorder %s145, %s146
      %p158 = scmp.eq.s32.totalorder %s31, 1
      %p159 = por %p157, %p158
      %p161 = scmp.ne.s32.totalorder %s146, %s160
      %p162 = scmp.eq.s32.totalorder %s31, 0
      %p163 = por %p161, %p162
      %s165 = sadd.s32 %s164, 1
      %p168 = scmp.eq.s32.totalorder %s25, 1
      %p169 = scmp.ne.s32.totalorder %s164, %s166
      %p170 = scmp.eq.s32.totalorder %s25, 0
      %p171 = por %p169, %p170
      %p172 = scmp.ne.s32.totalorder %s164, %s166
      %p173 = scmp.eq.s32.totalorder %s30, 1
      %p174 = por %p172, %p173
      %p175 = scmp.ne.s32.totalorder %s166, %s167
      %p176 = scmp.eq.s32.totalorder %s30, 0
      %p177 = por %p175, %p176
      %p178 = scmp.ne.s32.totalorder %s166, %s167
      %p179 = scmp.eq.s32.totalorder %s31, 1
      %p180 = por %p178, %p179
      %p182 = scmp.ne.s32.totalorder %s167, %s181
      %p183 = scmp.eq.s32.totalorder %s31, 0
      %p184 = por %p182, %p183
      %s186 = sadd.s32 %s185, 1
      %p189 = scmp.eq.s32.totalorder %s25, 1
      %p190 = scmp.ne.s32.totalorder %s185, %s187
      %p191 = scmp.eq.s32.totalorder %s25, 0
      %p192 = por %p190, %p191
      %p193 = scmp.ne.s32.totalorder %s185, %s187
      %p194 = scmp.eq.s32.totalorder %s30, 1
      %p195 = por %p193, %p194
      %p196 = scmp.ne.s32.totalorder %s187, %s188
      %p197 = scmp.eq.s32.totalorder %s30, 0
      %p198 = por %p196, %p197
      %p199 = scmp.ne.s32.totalorder %s187, %s188
      %p200 = scmp.eq.s32.totalorder %s31, 1
      %p201 = por %p199, %p200
      %p203 = scmp.ne.s32.totalorder %s188, %s202
      %p204 = scmp.eq.s32.totalorder %s31, 0
      %p205 = por %p203, %p204
      %s207 = sadd.s32 %s206, 1
      %p210 = scmp.eq.s32.totalorder %s25, 1
      %p211 = scmp.ne.s32.totalorder %s206, %s208
      %p212 = scmp.eq.s32.totalorder %s25, 0
      %p213 = por %p211, %p212
      %p214 = scmp.ne.s32.totalorder %s206, %s208
      %p215 = scmp.eq.s32.totalorder %s30, 1
      %p216 = por %p214, %p215
      %p217 = scmp.ne.s32.totalorder %s208, %s209
      %p218 = scmp.eq.s32.totalorder %s30, 0
      %p219 = por %p217, %p218
      %p220 = scmp.ne.s32.totalorder %s208, %s209
      %p221 = scmp.eq.s32.totalorder %s31, 1
      %p222 = por %p220, %p221
      %p224 = scmp.ne.s32.totalorder %s209, %s223
      %p225 = scmp.eq.s32.totalorder %s31, 0
      %p226 = por %p224, %p225
      %s228 = sadd.s32 %s227, 1
      %p231 = scmp.eq.s32.totalorder %s25, 1
      %p232 = scmp.ne.s32.totalorder %s227, %s229
      %p233 = scmp.eq.s32.totalorder %s25, 0
      %p234 = por %p232, %p233
      %p235 = scmp.ne.s32.totalorder %s227, %s229
      %p236 = scmp.eq.s32.totalorder %s30, 1
      %p237 = por %p235, %p236
      %p238 = scmp.ne.s32.totalorder %s229, %s230
      %p239 = scmp.eq.s32.totalorder %s30, 0
      %p240 = por %p238, %p239
      %p241 = scmp.ne.s32.totalorder %s229, %s230
      %p242 = scmp.eq.s32.totalorder %s31, 1
      %p243 = por %p241, %p242
      %p245 = scmp.ne.s32.totalorder %s230, %s244
      %p246 = scmp.eq.s32.totalorder %s31, 0
      %p247 = por %p245, %p246
      %s249 = sadd.s32 %s248, 1
      %p252 = scmp.eq.s32.totalorder %s25, 1
      %p253 = scmp.ne.s32.totalorder %s248, %s250
      %p254 = scmp.eq.s32.totalorder %s25, 0
      %p255 = por %p253, %p254
      %p256 = scmp.ne.s32.totalorder %s248, %s250
      %p257 = scmp.eq.s32.totalorder %s30, 1
      %p258 = por %p256, %p257
      %p259 = scmp.ne.s32.totalorder %s250, %s251
      %p260 = scmp.eq.s32.totalorder %s30, 0
      %p261 = por %p259, %p260
      %p262 = scmp.ne.s32.totalorder %s250, %s251
      %p263 = scmp.eq.s32.totalorder %s31, 1
      %p264 = por %p262, %p263
      %p266 = scmp.ne.s32.totalorder %s251, %s265
      %p267 = scmp.eq.s32.totalorder %s31, 0
      %p268 = por %p266, %p267
      %s269 = ssub.s32 %s25, %s32
      %p270 = scmp.eq.s32.totalorder %s269, 0
      %s272 = sadd.s32 %s271, 1
      %s273 = scalar_select %p270, %s271, %s272
      %p276 = pneg %p270
      %p277 = scmp.eq.s32.totalorder %s25, 1
      %p278 = por %p276, %p277
      %p279 = scmp.ne.s32.totalorder %s271, %s274
      %p280 = scmp.eq.s32.totalorder %s25, 0
      %p281 = por %p279, %p280
      %p282 = scmp.ne.s32.totalorder %s271, %s274
      %p283 = scmp.eq.s32.totalorder %s30, 1
      %p284 = por %p282, %p283
      %p285 = scmp.ne.s32.totalorder %s274, %s275
      %p286 = scmp.eq.s32.totalorder %s30, 0
      %p287 = por %p285, %p286
      %p288 = scmp.ne.s32.totalorder %s274, %s275
      %p289 = scmp.eq.s32.totalorder %s31, 1
      %p290 = por %p288, %p289
      %p292 = scmp.ne.s32.totalorder %s275, %s291
      %p293 = scmp.eq.s32.totalorder %s31, 0
      %p294 = por %p292, %p293
      %s295 = ssub.s32 %s25, %s32
      %p296 = scmp.eq.s32.totalorder %s295, 0
      %s298 = sadd.s32 %s297, 1
      %s299 = scalar_select %p296, %s297, %s298
      %p302 = pneg %p296
      %p303 = scmp.eq.s32.totalorder %s25, 1
      %p304 = por %p302, %p303
      %p305 = scmp.ne.s32.totalorder %s297, %s300
      %p306 = scmp.eq.s32.totalorder %s25, 0
      %p307 = por %p305, %p306
      %p308 = scmp.ne.s32.totalorder %s297, %s300
      %p309 = scmp.eq.s32.totalorder %s30, 1
      %p310 = por %p308, %p309
      %p311 = scmp.ne.s32.totalorder %s300, %s301
      %p312 = scmp.eq.s32.totalorder %s30, 0
      %p313 = por %p311, %p312
      %p314 = scmp.ne.s32.totalorder %s300, %s301
      %p315 = scmp.eq.s32.totalorder %s31, 1
      %p316 = por %p314, %p315
      %p318 = scmp.ne.s32.totalorder %s301, %s317
      %p319 = scmp.eq.s32.totalorder %s31, 0
      %p320 = por %p318, %p319
      %p321 = scmp.le.s32.totalorder 1, %s25
      %p322 = scmp.lt.s32.totalorder %s25, 3
      %p323 = pnand %p321, %p322
      %p324 = pneg %p323
      // Predicated region
      $region9: #{tpu_custom_call.1} parent=5 // pred_check
        _
      $region10: #{tpu_custom_call.1} parent=5 // pred_check_branch
        %326 = sbr.rel (%p323) target = $region12
      $region11: #{tpu_custom_call.1} parent=5 // pred_region
        %s327 = ssub.s32 %s25, 1
        // Predicated region
        $region13: #{tpu_custom_call.1} parent=11 // pred_check
          %p328 = pneg %p72
        $region14: #{tpu_custom_call.1} parent=11 // pred_check_branch
          %330 = sbr.rel (%p328) target = $region16
        $region15: #{tpu_custom_call.1} parent=11 // pred_region
          _
        $region16: #{tpu_custom_call.1} parent=11 // pred_fallthru
          _
        // Predicated region
        $region17: #{tpu_custom_call.1} parent=11 // pred_check
          %p331 = pneg %p93
        $region18: #{tpu_custom_call.1} parent=11 // pred_check_branch
          %333 = sbr.rel (%p331) target = $region20
        $region19: #{tpu_custom_call.1} parent=11 // pred_region
          _
        $region20: #{tpu_custom_call.1} parent=11 // pred_fallthru
          _
        // Predicated region
        $region21: #{tpu_custom_call.1} parent=11 // pred_check
          %p334 = pneg %p114
        $region22: #{tpu_custom_call.1} parent=11 // pred_check_branch
          %336 = sbr.rel (%p334) target = $region24
        $region23: #{tpu_custom_call.1} parent=11 // pred_region
          _
        $region24: #{tpu_custom_call.1} parent=11 // pred_fallthru
          _
        // Predicated region
        $region25: #{tpu_custom_call.1} parent=11 // pred_check
          %p337 = pneg %p135
        $region26: #{tpu_custom_call.1} parent=11 // pred_check_branch
          %339 = sbr.rel (%p337) target = $region28
        $region27: #{tpu_custom_call.1} parent=11 // pred_region
          _
        $region28: #{tpu_custom_call.1} parent=11 // pred_fallthru
          _
        // Predicated region
        $region29: #{tpu_custom_call.1} parent=11 // pred_check
          %p340 = pneg %p156
        $region30: #{tpu_custom_call.1} parent=11 // pred_check_branch
          %342 = sbr.rel (%p340) target = $region32
        $region31: #{tpu_custom_call.1} parent=11 // pred_region
          _
        $region32: #{tpu_custom_call.1} parent=11 // pred_fallthru
          _
        // Predicated region
        $region33: #{tpu_custom_call.1} parent=11 // pred_check
          %p343 = pneg %p177
        $region34: #{tpu_custom_call.1} parent=11 // pred_check_branch
          %345 = sbr.rel (%p343) target = $region36
        $region35: #{tpu_custom_call.1} parent=11 // pred_region
          _
        $region36: #{tpu_custom_call.1} parent=11 // pred_fallthru
          _
        // Predicated region
        $region37: #{tpu_custom_call.1} parent=11 // pred_check
          %p346 = pneg %p198
        $region38: #{tpu_custom_call.1} parent=11 // pred_check_branch
          %348 = sbr.rel (%p346) target = $region40
        $region39: #{tpu_custom_call.1} parent=11 // pred_region
          _
        $region40: #{tpu_custom_call.1} parent=11 // pred_fallthru
          _
        // Predicated region
        $region41: #{tpu_custom_call.1} parent=11 // pred_check
          %p349 = pneg %p219
        $region42: #{tpu_custom_call.1} parent=11 // pred_check_branch
          %351 = sbr.rel (%p349) target = $region44
        $region43: #{tpu_custom_call.1} parent=11 // pred_region
          _
        $region44: #{tpu_custom_call.1} parent=11 // pred_fallthru
          _
        // Predicated region
        $region45: #{tpu_custom_call.1} parent=11 // pred_check
          %p352 = pneg %p240
        $region46: #{tpu_custom_call.1} parent=11 // pred_check_branch
          %354 = sbr.rel (%p352) target = $region48
        $region47: #{tpu_custom_call.1} parent=11 // pred_region
          _
        $region48: #{tpu_custom_call.1} parent=11 // pred_fallthru
          _
        // Predicated region
        $region49: #{tpu_custom_call.1} parent=11 // pred_check
          %p355 = pneg %p261
        $region50: #{tpu_custom_call.1} parent=11 // pred_check_branch
          %357 = sbr.rel (%p355) target = $region52
        $region51: #{tpu_custom_call.1} parent=11 // pred_region
          _
        $region52: #{tpu_custom_call.1} parent=11 // pred_fallthru
          _
      $region12: #{tpu_custom_call.1} parent=5 // pred_fallthru
        _
      %p358 = scmp.lt.s32.totalorder %s25, 2
      // Predicated region
      $region53: #{tpu_custom_call.1} parent=5 // pred_check
        %p359 = pneg %p358
      $region54: #{tpu_custom_call.1} parent=5 // pred_check_branch
        %361 = sbr.rel (%p359) target = $region56
      $region55: #{tpu_custom_call.1} parent=5 // pred_region
        // Predicated region
        $region57: #{tpu_custom_call.1} parent=55 // pred_check
          %p362 = pneg %p45
        $region58: #{tpu_custom_call.1} parent=55 // pred_check_branch
          %364 = sbr.rel (%p362) target = $region60
        $region59: #{tpu_custom_call.1} parent=55 // pred_region
          %p365 = scmp.lt.s32.totalorder %s25, 1
          %s366 = scalar_select %p365, %s25, 1
          %s367 = smul.addr %s366, 8
          %s368 = scalar_lea.vmem %s0, %s367
        $region60: #{tpu_custom_call.1} parent=55 // pred_fallthru
          _
      $region56: #{tpu_custom_call.1} parent=5 // pred_fallthru
        _
      %p369 = scmp.le.s32.totalorder 1, %s25
      %p370 = scmp.lt.s32.totalorder %s25, 3
      %p371 = pnand %p369, %p370
      %p372 = pneg %p371
      // Predicated region
      $region61: #{tpu_custom_call.1} parent=5 // pred_check
        _
      $region62: #{tpu_custom_call.1} parent=5 // pred_check_branch
        %374 = sbr.rel (%p371) target = $region64
      $region63: #{tpu_custom_call.1} parent=5 // pred_region
        %s375 = ssub.s32 %s25, 1
        %p376 = scmp.lt.s32.totalorder %s30, 1
        %s377 = scalar_select %p376, %s30, 1
        %s378 = smul.addr %s377, 8
        %s379 = scalar_lea.vmem %s0, %s378
        %p380 = pneg %p51
        %p381 = pneg %p48
        %p382 = pneg %p72
        %p383 = pneg %p69
        %p384 = pneg %p93
        %p385 = pneg %p90
        %p386 = pneg %p114
        %p387 = pneg %p111
        %p388 = pneg %p135
        %p389 = pneg %p132
        %p390 = pneg %p156
        %p391 = pneg %p153
        %p392 = pneg %p177
        %p393 = pneg %p174
        %p394 = pneg %p198
        %p395 = pneg %p195
        %p396 = pneg %p219
        %p397 = pneg %p216
        %p398 = pneg %p240
        %p399 = pneg %p237
        %p400 = pneg %p261
        %p401 = pneg %p258
        %p402 = pneg %p287
        %p403 = pneg %p284
        %s404 = sand.u32 %s274, 1
        %s405 = scalar_lea.sflag [#allocation3], %s404
        %s406 = sand.u32 %s274, 1
        %s407 = smul.addr %s406, 8
        %s408 = scalar_lea.vmem [#allocation2], %s407
        %p409 = pneg %p313
        %p410 = pneg %p310
        %s411 = sand.u32 %s300, 1
        %s412 = scalar_lea.sflag [#allocation5], %s411
        %s413 = sand.u32 %s300, 1
        %s414 = smul.addr %s413, 16
        %s415 = scalar_lea.vmem [#allocation4], %s414
        %p416 = scmp.lt.s32.totalorder %s30, 1
        %s417 = scalar_select %p416, %s30, 1
        %s418 = smul.addr %s417, 8
        %s419 = scalar_lea.vmem %s0, %s418
        %v421 = vld [vmem:[%s419] sm:$0xff]
        %v422 = vpack.c.bf16 %v421, %v421
        %v423 = vld [vmem:[%s1] sm:$0xf]
        %v424 = vld [vmem:[%s1 + $0x4] sm:$0xf]
        %v425 = vld [vmem:[%s1 + $0x8] sm:$0xf]
        %v426 = vld [vmem:[%s1 + $0xc] sm:$0xf]
        %v427 = vld [vmem:[%s2] sm:$0x1]
        %v429 = vlaneseq
        %v430 = vshrl.u32 %v429, 7
        %v431 = vsub.s32 0, %v430
        %v432 = vrot.slane %v427, %v431
        %v438 = vunpack.c.l.b16 %v423
        %v439 = vunpack.c.l.b16 %v424
        %v440 = vunpack.c.l.b16 %v425
        %v441 = vunpack.c.l.b16 %v426
        %v442 = vpack.c.b16 %v439, %v438
        %v443 = vpack.c.b16 %v441, %v440
        %vm446 = vcmask 261120
        %v448 = vsel %vm446, %v422, 0
        %450 = vmatprep.subr.bf16.mxu0 0
        %451 = vmatpush1.bf16.msra.mxu0 %v442
        %452 = vmatprep.subr.bf16.mxu0 0
        %453 = vmatpush1.bf16.msra.mxu0 %v443
        %454 = vmatprep.subr.bf16.mxu0 0
        %455 = vmatpush1.bf16.msra.mxu0 0
        %456 = vmatprep.subr.bf16.mxu0 0
        %457 = vmatpush1.bf16.msra.mxu0 0
        %458 = vmatprep.subr.bf16.mxu0 0
        %459 = vmatpush1.bf16.msra.mxu0 0
        %460 = vmatprep.subr.bf16.mxu0 0
        %461 = vmatpush1.bf16.msra.mxu0 0
        %462 = vmatprep.subr.bf16.mxu0 0
        %463 = vmatpush1.bf16.msra.mxu0 0
        %464 = vmatprep.subr.bf16.mxu0 0
        %465 = vmatpush1.bf16.msra.mxu0 0
        %466 = vmatprep.subr.bf16.mxu0 0
        %467 = vmatpush1.bf16.msra.mxu0 0
        %468 = vmatprep.subr.bf16.mxu0 0
        %469 = vmatpush1.bf16.msra.mxu0 0
        %470 = vmatprep.subr.bf16.mxu0 0
        %471 = vmatpush1.bf16.msra.mxu0 0
        %472 = vmatprep.subr.bf16.mxu0 0
        %473 = vmatpush1.bf16.msra.mxu0 0
        %474 = vmatprep.subr.bf16.mxu0 0
        %475 = vmatpush1.bf16.msra.mxu0 0
        %476 = vmatprep.subr.bf16.mxu0 0
        %477 = vmatpush1.bf16.msra.mxu0 0
        %478 = vmatprep.subr.bf16.mxu0 0
        %479 = vmatpush1.bf16.msra.mxu0 0
        %480 = vmatprep.subr.bf16.mxu0 0
        %481 = vmatpush1.bf16.msra.mxu0 0
        %482 = vmatprep.mubr.bf16.mxu0 0
        %483 = vmatmul.mubr.bf16.gmra.mrb[0].mxu0 %v448
        %v484 = vpop.f32.mrb[0].mxu0
        %v485 = vadd.f32 %v432, %v484
        %v486 = vpop.f32.mrb[0].mxu0
        %v487 = vpop.f32.mrb[0].mxu0
        %v488 = vpop.f32.mrb[0].mxu0
        %489 = vdwg.mxu0
        %491 = vrot.lane.b32.xlu0 %v485, 120
        %v492 = vpop.permute.xlu0 %491
        %494 = vrot.lane.b32.xlu0 %v485, 112
        %v495 = vpop.permute.xlu0 %494
        %497 = vrot.lane.b32.xlu0 %v485, 104
        %v498 = vpop.permute.xlu0 %497
        %500 = vrot.lane.b32.xlu0 %v485, 96
        %v501 = vpop.permute.xlu0 %500
        %503 = vrot.lane.b32.xlu0 %v485, 88
        %v504 = vpop.permute.xlu0 %503
        %506 = vrot.lane.b32.xlu0 %v485, 80
        %v507 = vpop.permute.xlu0 %506
        %509 = vrot.lane.b32.xlu0 %v485, 72
        %v510 = vpop.permute.xlu0 %509
        %512 = vrot.lane.b32.xlu0 %v485, 64
        %v513 = vpop.permute.xlu0 %512
        %515 = vrot.lane.b32.xlu0 %v485, 56
        %v516 = vpop.permute.xlu0 %515
        %518 = vrot.lane.b32.xlu0 %v485, 48
        %v519 = vpop.permute.xlu0 %518
        %521 = vrot.lane.b32.xlu0 %v485, 40
        %v522 = vpop.permute.xlu0 %521
        %v524 = vcombine.low %v485, %v495
        %v525 = vcombine.high %v485, %v495
        %v527 = vunpack.c.l.s4 1983009808
        %v528 = vunpack.c.0.s8 %v527
        %v529 = vlaneseq
        %v530 = vshrl.u32 %v529, 7
        %v531 = vsub.s32 %v528, %v530
        %v532 = vrot.slane %v524, %v531
        %v534 = vunpack.c.l.s4 1983009808
        %v535 = vunpack.c.0.s8 %v534
        %v536 = vlaneseq
        %v537 = vshrl.u32 %v536, 7
        %v538 = vsub.s32 %v535, %v537
        %v539 = vrot.slane %v525, %v538
        %v540 = vcombine.low %v492, %v498
        %v541 = vcombine.high %v492, %v498
        %v543 = vunpack.c.l.s4 1983009808
        %v544 = vunpack.c.0.s8 %v543
        %v545 = vlaneseq
        %v546 = vshrl.u32 %v545, 7
        %v547 = vsub.s32 %v544, %v546
        %v548 = vrot.slane %v540, %v547
        %v550 = vunpack.c.l.s4 1983009808
        %v551 = vunpack.c.0.s8 %v550
        %v552 = vlaneseq
        %v553 = vshrl.u32 %v552, 7
        %v554 = vsub.s32 %v551, %v553
        %v555 = vrot.slane %v541, %v554
        %v556 = vcombine.low %v501, %v507
        %v557 = vcombine.high %v501, %v507
        %v559 = vunpack.c.l.s4 1983009808
        %v560 = vunpack.c.0.s8 %v559
        %v561 = vlaneseq
        %v562 = vshrl.u32 %v561, 7
        %v563 = vsub.s32 %v560, %v562
        %v564 = vrot.slane %v556, %v563
        %v566 = vunpack.c.l.s4 1983009808
        %v567 = vunpack.c.0.s8 %v566
        %v568 = vlaneseq
        %v569 = vshrl.u32 %v568, 7
        %v570 = vsub.s32 %v567, %v569
        %v571 = vrot.slane %v557, %v570
        %v572 = vcombine.low %v504, %v510
        %v573 = vcombine.high %v504, %v510
        %v575 = vunpack.c.l.s4 1983009808
        %v576 = vunpack.c.0.s8 %v575
        %v577 = vlaneseq
        %v578 = vshrl.u32 %v577, 7
        %v579 = vsub.s32 %v576, %v578
        %v580 = vrot.slane %v572, %v579
        %v582 = vunpack.c.l.s4 1983009808
        %v583 = vunpack.c.0.s8 %v582
        %v584 = vlaneseq
        %v585 = vshrl.u32 %v584, 7
        %v586 = vsub.s32 %v583, %v585
        %v587 = vrot.slane %v573, %v586
        %v588 = vcombine.low %v532, %v548
        %v589 = vcombine.high %v532, %v548
        %v591 = vunpack.c.l.s4 1934713408
        %v592 = vunpack.c.0.s8 %v591
        %v593 = vlaneseq
        %v594 = vshrl.u32 %v593, 7
        %v595 = vsub.s32 %v592, %v594
        %v596 = vrot.slane %v588, %v595
        %v598 = vunpack.c.l.s4 1934713408
        %v599 = vunpack.c.0.s8 %v598
        %v600 = vlaneseq
        %v601 = vshrl.u32 %v600, 7
        %v602 = vsub.s32 %v599, %v601
        %v603 = vrot.slane %v589, %v602
        %v604 = vcombine.low %v539, %v555
        %v605 = vcombine.high %v539, %v555
        %v607 = vunpack.c.l.s4 1934713408
        %v608 = vunpack.c.0.s8 %v607
        %v609 = vlaneseq
        %v610 = vshrl.u32 %v609, 7
        %v611 = vsub.s32 %v608, %v610
        %v612 = vrot.slane %v604, %v611
        %v614 = vunpack.c.l.s4 1934713408
        %v615 = vunpack.c.0.s8 %v614
        %v616 = vlaneseq
        %v617 = vshrl.u32 %v616, 7
        %v618 = vsub.s32 %v615, %v617
        %v619 = vrot.slane %v605, %v618
        %v620 = vcombine.low %v564, %v580
        %v621 = vcombine.high %v564, %v580
        %v623 = vunpack.c.l.s4 1934713408
        %v624 = vunpack.c.0.s8 %v623
        %v625 = vlaneseq
        %v626 = vshrl.u32 %v625, 7
        %v627 = vsub.s32 %v624, %v626
        %v628 = vrot.slane %v620, %v627
        %v630 = vunpack.c.l.s4 1934713408
        %v631 = vunpack.c.0.s8 %v630
        %v632 = vlaneseq
        %v633 = vshrl.u32 %v632, 7
        %v634 = vsub.s32 %v631, %v633
        %v635 = vrot.slane %v621, %v634
        %v636 = vcombine.low %v571, %v587
        %v637 = vcombine.high %v571, %v587
        %v639 = vunpack.c.l.s4 1934713408
        %v640 = vunpack.c.0.s8 %v639
        %v641 = vlaneseq
        %v642 = vshrl.u32 %v641, 7
        %v643 = vsub.s32 %v640, %v642
        %v644 = vrot.slane %v636, %v643
        %v646 = vunpack.c.l.s4 1934713408
        %v647 = vunpack.c.0.s8 %v646
        %v648 = vlaneseq
        %v649 = vshrl.u32 %v648, 7
        %v650 = vsub.s32 %v647, %v649
        %v651 = vrot.slane %v637, %v650
        %v652 = vcombine.low %v596, %v628
        %v653 = vcombine.high %v596, %v628
        %v654 = vcombine.low %v603, %v635
        %v655 = vcombine.high %v603, %v635
        %v656 = vcombine.low %v612, %v644
        %v657 = vcombine.high %v612, %v644
        %v658 = vcombine.low %v619, %v651
        %v659 = vcombine.high %v619, %v651
        %v660 = vcombine.low %v513, %v519
        %v661 = vcombine.high %v513, %v519
        %v663 = vunpack.c.l.s4 1983009808
        %v664 = vunpack.c.0.s8 %v663
        %v665 = vlaneseq
        %v666 = vshrl.u32 %v665, 7
        %v667 = vsub.s32 %v664, %v666
        %v668 = vrot.slane %v660, %v667
        %v670 = vunpack.c.l.s4 1983009808
        %v671 = vunpack.c.0.s8 %v670
        %v672 = vlaneseq
        %v673 = vshrl.u32 %v672, 7
        %v674 = vsub.s32 %v671, %v673
        %v675 = vrot.slane %v661, %v674
        %v676 = vcombine.low %v516, %v522
        %v677 = vcombine.high %v516, %v522
        %v679 = vunpack.c.l.s4 1983009808
        %v680 = vunpack.c.0.s8 %v679
        %v681 = vlaneseq
        %v682 = vshrl.u32 %v681, 7
        %v683 = vsub.s32 %v680, %v682
        %v684 = vrot.slane %v676, %v683
        %v686 = vunpack.c.l.s4 1983009808
        %v687 = vunpack.c.0.s8 %v686
        %v688 = vlaneseq
        %v689 = vshrl.u32 %v688, 7
        %v690 = vsub.s32 %v687, %v689
        %v691 = vrot.slane %v677, %v690
        %v692 = vcombine.low %v668, %v684
        %v693 = vcombine.high %v668, %v684
        %v695 = vunpack.c.l.s4 1934713408
        %v696 = vunpack.c.0.s8 %v695
        %v697 = vlaneseq
        %v698 = vshrl.u32 %v697, 7
        %v699 = vsub.s32 %v696, %v698
        %v700 = vrot.slane %v692, %v699
        %v702 = vunpack.c.l.s4 1934713408
        %v703 = vunpack.c.0.s8 %v702
        %v704 = vlaneseq
        %v705 = vshrl.u32 %v704, 7
        %v706 = vsub.s32 %v703, %v705
        %v707 = vrot.slane %v693, %v706
        %v708 = vcombine.low %v675, %v691
        %v709 = vcombine.high %v675, %v691
        %v711 = vunpack.c.l.s4 1934713408
        %v712 = vunpack.c.0.s8 %v711
        %v713 = vlaneseq
        %v714 = vshrl.u32 %v713, 7
        %v715 = vsub.s32 %v712, %v714
        %v716 = vrot.slane %v708, %v715
        %v718 = vunpack.c.l.s4 1934713408
        %v719 = vunpack.c.0.s8 %v718
        %v720 = vlaneseq
        %v721 = vshrl.u32 %v720, 7
        %v722 = vsub.s32 %v719, %v721
        %v723 = vrot.slane %v709, %v722
        %v724 = vcombine.high %v700, 0.0
        %v725 = vcombine.high %v707, 0.0
        %v726 = vcombine.high %v716, 0.0
        %v727 = vcombine.high %v723, 0.0
        %v728 = vcombine.low %v652, %v654
        %v729 = vcombine.high %v652, %v654
        %v731 = vunpack.c.l.s4 1983009808
        %v732 = vunpack.c.0.s8 %v731
        %v733 = vlaneseq
        %v734 = vshrl.u32 %v733, 7
        %v735 = vsub.s32 %v732, %v734
        %v736 = vrot.slane %v728, %v735
        %v738 = vunpack.c.l.s4 1983009808
        %v739 = vunpack.c.0.s8 %v738
        %v740 = vlaneseq
        %v741 = vshrl.u32 %v740, 7
        %v742 = vsub.s32 %v739, %v741
        %v743 = vrot.slane %v729, %v742
        %v744 = vcombine.low %v653, %v655
        %v745 = vcombine.high %v653, %v655
        %v747 = vunpack.c.l.s4 1983009808
        %v748 = vunpack.c.0.s8 %v747
        %v749 = vlaneseq
        %v750 = vshrl.u32 %v749, 7
        %v751 = vsub.s32 %v748, %v750
        %v752 = vrot.slane %v744, %v751
        %v754 = vunpack.c.l.s4 1983009808
        %v755 = vunpack.c.0.s8 %v754
        %v756 = vlaneseq
        %v757 = vshrl.u32 %v756, 7
        %v758 = vsub.s32 %v755, %v757
        %v759 = vrot.slane %v745, %v758
        %v760 = vcombine.low %v656, %v658
        %v761 = vcombine.high %v656, %v658
        %v763 = vunpack.c.l.s4 1983009808
        %v764 = vunpack.c.0.s8 %v763
        %v765 = vlaneseq
        %v766 = vshrl.u32 %v765, 7
        %v767 = vsub.s32 %v764, %v766
        %v768 = vrot.slane %v760, %v767
        %v770 = vunpack.c.l.s4 1983009808
        %v771 = vunpack.c.0.s8 %v770
        %v772 = vlaneseq
        %v773 = vshrl.u32 %v772, 7
        %v774 = vsub.s32 %v771, %v773
        %v775 = vrot.slane %v761, %v774
        %v776 = vcombine.low %v657, %v659
        %v777 = vcombine.high %v657, %v659
        %v779 = vunpack.c.l.s4 1983009808
        %v780 = vunpack.c.0.s8 %v779
        %v781 = vlaneseq
        %v782 = vshrl.u32 %v781, 7
        %v783 = vsub.s32 %v780, %v782
        %v784 = vrot.slane %v776, %v783
        %v786 = vunpack.c.l.s4 1983009808
        %v787 = vunpack.c.0.s8 %v786
        %v788 = vlaneseq
        %v789 = vshrl.u32 %v788, 7
        %v790 = vsub.s32 %v787, %v789
        %v791 = vrot.slane %v777, %v790
        %v792 = vcombine.low %v736, %v752
        %v793 = vcombine.high %v736, %v752
        %v795 = vunpack.c.l.s4 1934713408
        %v796 = vunpack.c.0.s8 %v795
        %v797 = vlaneseq
        %v798 = vshrl.u32 %v797, 7
        %v799 = vsub.s32 %v796, %v798
        %v800 = vrot.slane %v792, %v799
        %v802 = vunpack.c.l.s4 1934713408
        %v803 = vunpack.c.0.s8 %v802
        %v804 = vlaneseq
        %v805 = vshrl.u32 %v804, 7
        %v806 = vsub.s32 %v803, %v805
        %v807 = vrot.slane %v793, %v806
        %v808 = vcombine.low %v743, %v759
        %v809 = vcombine.high %v743, %v759
        %v811 = vunpack.c.l.s4 1934713408
        %v812 = vunpack.c.0.s8 %v811
        %v813 = vlaneseq
        %v814 = vshrl.u32 %v813, 7
        %v815 = vsub.s32 %v812, %v814
        %v816 = vrot.slane %v808, %v815
        %v818 = vunpack.c.l.s4 1934713408
        %v819 = vunpack.c.0.s8 %v818
        %v820 = vlaneseq
        %v821 = vshrl.u32 %v820, 7
        %v822 = vsub.s32 %v819, %v821
        %v823 = vrot.slane %v809, %v822
        %v824 = vcombine.low %v768, %v784
        %v825 = vcombine.high %v768, %v784
        %v827 = vunpack.c.l.s4 1934713408
        %v828 = vunpack.c.0.s8 %v827
        %v829 = vlaneseq
        %v830 = vshrl.u32 %v829, 7
        %v831 = vsub.s32 %v828, %v830
        %v832 = vrot.slane %v824, %v831
        %v834 = vunpack.c.l.s4 1934713408
        %v835 = vunpack.c.0.s8 %v834
        %v836 = vlaneseq
        %v837 = vshrl.u32 %v836, 7
        %v838 = vsub.s32 %v835, %v837
        %v839 = vrot.slane %v825, %v838
        %v840 = vcombine.low %v775, %v791
        %v841 = vcombine.high %v775, %v791
        %v843 = vunpack.c.l.s4 1934713408
        %v844 = vunpack.c.0.s8 %v843
        %v845 = vlaneseq
        %v846 = vshrl.u32 %v845, 7
        %v847 = vsub.s32 %v844, %v846
        %v848 = vrot.slane %v840, %v847
        %v850 = vunpack.c.l.s4 1934713408
        %v851 = vunpack.c.0.s8 %v850
        %v852 = vlaneseq
        %v853 = vshrl.u32 %v852, 7
        %v854 = vsub.s32 %v851, %v853
        %v855 = vrot.slane %v841, %v854
        %v856 = vcombine.low %v800, %v832
        %v857 = vcombine.high %v800, %v832
        %v858 = vcombine.low %v807, %v839
        %v859 = vcombine.high %v807, %v839
        %v860 = vcombine.low %v816, %v848
        %v861 = vcombine.high %v816, %v848
        %v862 = vcombine.low %v823, %v855
        %v863 = vcombine.high %v823, %v855
        %v864 = vcombine.low %v700, %v707
        %v866 = vunpack.c.l.s4 1983009808
        %v867 = vunpack.c.0.s8 %v866
        %v868 = vlaneseq
        %v869 = vshrl.u32 %v868, 7
        %v870 = vsub.s32 %v867, %v869
        %v871 = vrot.slane %v864, %v870
        %v872 = vcombine.low %v724, %v725
        %v874 = vunpack.c.l.s4 1983009808
        %v875 = vunpack.c.0.s8 %v874
        %v876 = vlaneseq
        %v877 = vshrl.u32 %v876, 7
        %v878 = vsub.s32 %v875, %v877
        %v879 = vrot.slane %v872, %v878
        %v880 = vcombine.low %v716, %v723
        %v882 = vunpack.c.l.s4 1983009808
        %v883 = vunpack.c.0.s8 %v882
        %v884 = vlaneseq
        %v885 = vshrl.u32 %v884, 7
        %v886 = vsub.s32 %v883, %v885
        %v887 = vrot.slane %v880, %v886
        %v888 = vcombine.low %v726, %v727
        %v890 = vunpack.c.l.s4 1983009808
        %v891 = vunpack.c.0.s8 %v890
        %v892 = vlaneseq
        %v893 = vshrl.u32 %v892, 7
        %v894 = vsub.s32 %v891, %v893
        %v895 = vrot.slane %v888, %v894
        %v896 = vcombine.low %v871, %v879
        %v897 = vcombine.high %v871, %v879
        %v899 = vunpack.c.l.s4 1934713408
        %v900 = vunpack.c.0.s8 %v899
        %v901 = vlaneseq
        %v902 = vshrl.u32 %v901, 7
        %v903 = vsub.s32 %v900, %v902
        %v904 = vrot.slane %v896, %v903
        %v906 = vunpack.c.l.s4 1934713408
        %v907 = vunpack.c.0.s8 %v906
        %v908 = vlaneseq
        %v909 = vshrl.u32 %v908, 7
        %v910 = vsub.s32 %v907, %v909
        %v911 = vrot.slane %v897, %v910
        %v912 = vcombine.low %v887, %v895
        %v913 = vcombine.high %v887, %v895
        %v915 = vunpack.c.l.s4 1934713408
        %v916 = vunpack.c.0.s8 %v915
        %v917 = vlaneseq
        %v918 = vshrl.u32 %v917, 7
        %v919 = vsub.s32 %v916, %v918
        %v920 = vrot.slane %v912, %v919
        %v922 = vunpack.c.l.s4 1934713408
        %v923 = vunpack.c.0.s8 %v922
        %v924 = vlaneseq
        %v925 = vshrl.u32 %v924, 7
        %v926 = vsub.s32 %v923, %v925
        %v927 = vrot.slane %v913, %v926
        %v928 = vcombine.low %v904, %v920
        %v929 = vcombine.high %v904, %v920
        %v930 = vcombine.low %v911, %v927
        %v931 = vcombine.high %v911, %v927
        %v932 = vpack.c.bf16 %v856, %v856
        %v933 = vpack.c.bf16 %v857, %v857
        %v934 = vpack.c.bf16 %v858, %v858
        %v935 = vpack.c.bf16 %v859, %v859
        %v936 = vpack.c.bf16 %v860, %v860
        %v937 = vpack.c.bf16 %v861, %v861
        %v938 = vpack.c.bf16 %v862, %v862
        %v939 = vpack.c.bf16 %v863, %v863
        %v940 = vpack.c.bf16 %v928, %v928
        %v941 = vpack.c.bf16 %v929, %v929
        %v942 = vpack.c.bf16 %v930, %v930
        %v943 = vpack.c.bf16 %v931, %v931
        %v944 = vlaneseq
        %v945 = vshrl.u32 %v944, 7
        %v946 = vlaneseq
        %v947 = vand.u32 %v946, 127
        %vm948 = vcmp.le.s32.totalorder %v947, %v945
        %vm949 = vcmask 64512
        %v951 = vsel %vm949, %v932, 0
        %v954 = vsel %vm949, %v936, 0
        %956 = vmatprep.subr.bf16.mxu0 0
        %957 = vmatpush1.bf16.xpose.msra.mxu0 %v954
        %958 = vmatprep.subr.bf16.mxu0 0
        %959 = vmatpush1.bf16.xpose.msra.mxu0 0
        %960 = vmatprep.subr.bf16.mxu0 0
        %961 = vmatpush1.bf16.xpose.msra.mxu0 0
        %962 = vmatprep.subr.bf16.mxu0 0
        %963 = vmatpush1.bf16.xpose.msra.mxu0 0
        %964 = vmatprep.subr.bf16.mxu0 0
        %965 = vmatpush1.bf16.xpose.msra.mxu0 0
        %966 = vmatprep.subr.bf16.mxu0 0
        %967 = vmatpush1.bf16.xpose.msra.mxu0 0
        %968 = vmatprep.subr.bf16.mxu0 0
        %969 = vmatpush1.bf16.xpose.msra.mxu0 0
        %970 = vmatprep.subr.bf16.mxu0 0
        %971 = vmatpush1.bf16.xpose.msra.mxu0 0
        %972 = vmatprep.subr.bf16.mxu0 0
        %973 = vmatpush1.bf16.xpose.msra.mxu0 0
        %974 = vmatprep.subr.bf16.mxu0 0
        %975 = vmatpush1.bf16.xpose.msra.mxu0 0
        %976 = vmatprep.subr.bf16.mxu0 0
        %977 = vmatpush1.bf16.xpose.msra.mxu0 0
        %978 = vmatprep.subr.bf16.mxu0 0
        %979 = vmatpush1.bf16.xpose.msra.mxu0 0
        %980 = vmatprep.subr.bf16.mxu0 0
        %981 = vmatpush1.bf16.xpose.msra.mxu0 0
        %982 = vmatprep.subr.bf16.mxu0 0
        %983 = vmatpush1.bf16.xpose.msra.mxu0 0
        %984 = vmatprep.subr.bf16.mxu0 0
        %985 = vmatpush1.bf16.xpose.msra.mxu0 0
        %986 = vmatprep.subr.bf16.mxu0 0
        %987 = vmatpush1.bf16.xpose.msra.mxu0 0
        %988 = vmatprep.mubr.bf16.mxu0 0
        %989 = vmatmul.mubr.bf16.gmra.mrb[0].mxu0 %v951
        %v990 = vpop.f32.mrb[0].mxu0
        %v991 = vadd.f32 0.0, %v990
        %v992 = vpop.f32.mrb[0].mxu0
        %v993 = vpop.f32.mrb[0].mxu0
        %v994 = vpop.f32.mrb[0].mxu0
        %995 = vdwg.mxu0
        %v997 = vsel %vm949, %v933, 0
        %v1000 = vsel %vm949, %v937, 0
        %1002 = vmatprep.subr.bf16.mxu0 0
        %1003 = vmatpush1.bf16.xpose.msra.mxu0 %v1000
        %1004 = vmatprep.subr.bf16.mxu0 0
        %1005 = vmatpush1.bf16.xpose.msra.mxu0 0
        %1006 = vmatprep.subr.bf16.mxu0 0
        %1007 = vmatpush1.bf16.xpose.msra.mxu0 0
        %1008 = vmatprep.subr.bf16.mxu0 0
        %1009 = vmatpush1.bf16.xpose.msra.mxu0 0
        %1010 = vmatprep.subr.bf16.mxu0 0
        %1011 = vmatpush1.bf16.xpose.msra.mxu0 0
        %1012 = vmatprep.subr.bf16.mxu0 0
        %1013 = vmatpush1.bf16.xpose.msra.mxu0 0
        %1014 = vmatprep.subr.bf16.mxu0 0
        %1015 = vmatpush1.bf16.xpose.msra.mxu0 0
        %1016 = vmatprep.subr.bf16.mxu0 0
        %1017 = vmatpush1.bf16.xpose.msra.mxu0 0
        %1018 = vmatprep.subr.bf16.mxu0 0
        %1019 = vmatpush1.bf16.xpose.msra.mxu0 0
        %1020 = vmatprep.subr.bf16.mxu0 0
        %1021 = vmatpush1.bf16.xpose.msra.mxu0 0
        %1022 = vmatprep.subr.bf16.mxu0 0
        %1023 = vmatpush1.bf16.xpose.msra.mxu0 0
        %1024 = vmatprep.subr.bf16.mxu0 0
        %1025 = vmatpush1.bf16.xpose.msra.mxu0 0
        %1026 = vmatprep.subr.bf16.mxu0 0
        %1027 = vmatpush1.bf16.xpose.msra.mxu0 0
        %1028 = vmatprep.subr.bf16.mxu0 0
        %1029 = vmatpush1.bf16.xpose.msra.mxu0 0
        %1030 = vmatprep.subr.bf16.mxu0 0
        %1031 = vmatpush1.bf16.xpose.msra.mxu0 0
        %1032 = vmatprep.subr.bf16.mxu0 0
        %1033 = vmatpush1.bf16.xpose.msra.mxu0 0
        %1034 = vmatprep.mubr.bf16.mxu0 0
        %1035 = vmatmul.mubr.bf16.gmra.mrb[0].mxu0 %v997
        %v1036 = vpop.f32.mrb[0].mxu0
        %v1037 = vadd.f32 0.0, %v1036
        %v1038 = vpop.f32.mrb[0].mxu0
        %v1039 = vpop.f32.mrb[0].mxu0
        %v1040 = vpop.f32.mrb[0].mxu0
        %1041 = vdwg.mxu0
        %v1043 = vsel %vm949, %v934, 0
        %v1046 = vsel %vm949, %v938, 0
        %1048 = vmatprep.subr.bf16.mxu0 0
        %1049 = vmatpush1.bf16.xpose.msra.mxu0 %v1046
        %1050 = vmatprep.subr.bf16.mxu0 0
        %1051 = vmatpush1.bf16.xpose.msra.mxu0 0
        %1052 = vmatprep.subr.bf16.mxu0 0
        %1053 = vmatpush1.bf16.xpose.msra.mxu0 0
        %1054 = vmatprep.subr.bf16.mxu0 0
        %1055 = vmatpush1.bf16.xpose.msra.mxu0 0
        %1056 = vmatprep.subr.bf16.mxu0 0
        %1057 = vmatpush1.bf16.xpose.msra.mxu0 0
        %1058 = vmatprep.subr.bf16.mxu0 0
        %1059 = vmatpush1.bf16.xpose.msra.mxu0 0
        %1060 = vmatprep.subr.bf16.mxu0 0
        %1061 = vmatpush1.bf16.xpose.msra.mxu0 0
        %1062 = vmatprep.subr.bf16.mxu0 0
        %1063 = vmatpush1.bf16.xpose.msra.mxu0 0
        %1064 = vmatprep.subr.bf16.mxu0 0
        %1065 = vmatpush1.bf16.xpose.msra.mxu0 0
        %1066 = vmatprep.subr.bf16.mxu0 0
        %1067 = vmatpush1.bf16.xpose.msra.mxu0 0
        %1068 = vmatprep.subr.bf16.mxu0 0
        %1069 = vmatpush1.bf16.xpose.msra.mxu0 0
        %1070 = vmatprep.subr.bf16.mxu0 0
        %1071 = vmatpush1.bf16.xpose.msra.mxu0 0
        %1072 = vmatprep.subr.bf16.mxu0 0
        %1073 = vmatpush1.bf16.xpose.msra.mxu0 0
        %1074 = vmatprep.subr.bf16.mxu0 0
        %1075 = vmatpush1.bf16.xpose.msra.mxu0 0
        %1076 = vmatprep.subr.bf16.mxu0 0
        %1077 = vmatpush1.bf16.xpose.msra.mxu0 0
        %1078 = vmatprep.subr.bf16.mxu0 0
        %1079 = vmatpush1.bf16.xpose.msra.mxu0 0
        %1080 = vmatprep.mubr.bf16.mxu0 0
        %1081 = vmatmul.mubr.bf16.gmra.mrb[0].mxu0 %v1043
        %v1082 = vpop.f32.mrb[0].mxu0
        %v1083 = vadd.f32 0.0, %v1082
        %v1084 = vpop.f32.mrb[0].mxu0
        %v1085 = vpop.f32.mrb[0].mxu0
        %v1086 = vpop.f32.mrb[0].mxu0
        %1087 = vdwg.mxu0
        %v1089 = vsel %vm949, %v935, 0
        %v1092 = vsel %vm949, %v939, 0
        %1094 = vmatprep.subr.bf16.mxu0 0
        %1095 = vmatpush1.bf16.xpose.msra.mxu0 %v1092
        %1096 = vmatprep.subr.bf16.mxu0 0
        %1097 = vmatpush1.bf16.xpose.msra.mxu0 0
        %1098 = vmatprep.subr.bf16.mxu0 0
        %1099 = vmatpush1.bf16.xpose.msra.mxu0 0
        %1100 = vmatprep.subr.bf16.mxu0 0
        %1101 = vmatpush1.bf16.xpose.msra.mxu0 0
        %1102 = vmatprep.subr.bf16.mxu0 0
        %1103 = vmatpush1.bf16.xpose.msra.mxu0 0
        %1104 = vmatprep.subr.bf16.mxu0 0
        %1105 = vmatpush1.bf16.xpose.msra.mxu0 0
        %1106 = vmatprep.subr.bf16.mxu0 0
        %1107 = vmatpush1.bf16.xpose.msra.mxu0 0
        %1108 = vmatprep.subr.bf16.mxu0 0
        %1109 = vmatpush1.bf16.xpose.msra.mxu0 0
        %1110 = vmatprep.subr.bf16.mxu0 0
        %1111 = vmatpush1.bf16.xpose.msra.mxu0 0
        %1112 = vmatprep.subr.bf16.mxu0 0
        %1113 = vmatpush1.bf16.xpose.msra.mxu0 0
        %1114 = vmatprep.subr.bf16.mxu0 0
        %1115 = vmatpush1.bf16.xpose.msra.mxu0 0
        %1116 = vmatprep.subr.bf16.mxu0 0
        %1117 = vmatpush1.bf16.xpose.msra.mxu0 0
        %1118 = vmatprep.subr.bf16.mxu0 0
        %1119 = vmatpush1.bf16.xpose.msra.mxu0 0
        %1120 = vmatprep.subr.bf16.mxu0 0
        %1121 = vmatpush1.bf16.xpose.msra.mxu0 0
        %1122 = vmatprep.subr.bf16.mxu0 0
        %1123 = vmatpush1.bf16.xpose.msra.mxu0 0
        %1124 = vmatprep.subr.bf16.mxu0 0
        %1125 = vmatpush1.bf16.xpose.msra.mxu0 0
        %1126 = vmatprep.mubr.bf16.mxu0 0
        %1127 = vmatmul.mubr.bf16.gmra.mrb[0].mxu0 %v1089
        %v1128 = vpop.f32.mrb[0].mxu0
        %v1129 = vadd.f32 0.0, %v1128
        %v1130 = vpop.f32.mrb[0].mxu0
        %v1131 = vpop.f32.mrb[0].mxu0
        %v1132 = vpop.f32.mrb[0].mxu0
        %1133 = vdwg.mxu0
        %v1134 = vmul.f32 %v991, 0.35355338
        %v1135 = vmul.f32 %v1037, 0.35355338
        %v1136 = vmul.f32 %v1083, 0.35355338
        %v1137 = vmul.f32 %v1129, 0.35355338
        %v1138 = vsel %vm948, 1, 0
        %vm1139 = vcmp.eq.s32.totalorder %v1138, 1
        %v1140 = vsel %vm1139, %v1134, -1e+20
        %v1141 = vsel %vm1139, %v1135, -1e+20
        %v1142 = vsel %vm1139, %v1136, -1e+20
        %v1143 = vsel %vm1139, %v1137, -1e+20
        %v1144 = vsel %vm949, %v1140, -inf
        %1145 = vmax.xlane.f32.xlu0 %v1144
        %v1146 = vpop.xlane.xlu0 %1145
        %v1147 = vsel %vm949, %v1141, -inf
        %1148 = vmax.xlane.f32.xlu0 %v1147
        %v1149 = vpop.xlane.xlu0 %1148
        %v1150 = vsel %vm949, %v1142, -inf
        %1151 = vmax.xlane.f32.xlu0 %v1150
        %v1152 = vpop.xlane.xlu0 %1151
        %v1153 = vsel %vm949, %v1143, -inf
        %1154 = vmax.xlane.f32.xlu0 %v1153
        %v1155 = vpop.xlane.xlu0 %1154
        %v1156 = vsub.f32 %v1140, %v1146
        %v1157 = vsub.f32 %v1141, %v1149
        %v1158 = vsub.f32 %v1142, %v1152
        %v1159 = vsub.f32 %v1143, %v1155
        %v1160 = vmul.f32 %v1156, 1.442695
        %v1161 = vpow.pop %v1160
        %v1162 = vmul.f32 %v1157, 1.442695
        %v1163 = vpow.pop %v1162
        %v1164 = vmul.f32 %v1158, 1.442695
        %v1165 = vpow.pop %v1164
        %v1166 = vmul.f32 %v1159, 1.442695
        %v1167 = vpow.pop %v1166
        %v1168 = vsel %vm949, %v1161, 0.0
        %1169 = vadd.xlane.f32.xlu0 %v1168
        %v1170 = vpop.xlane.xlu0 %1169
        %v1171 = vsel %vm949, %v1163, 0.0
        %1172 = vadd.xlane.f32.xlu0 %v1171
        %v1173 = vpop.xlane.xlu0 %1172
        %v1174 = vsel %vm949, %v1165, 0.0
        %1175 = vadd.xlane.f32.xlu0 %v1174
        %v1176 = vpop.xlane.xlu0 %1175
        %v1177 = vsel %vm949, %v1167, 0.0
        %1178 = vadd.xlane.f32.xlu0 %v1177
        %v1179 = vpop.xlane.xlu0 %1178
        %v1180 = vrcp.pop %v1170
        %v1181 = vrcp.pop %v1173
        %v1182 = vrcp.pop %v1176
        %v1183 = vrcp.pop %v1179
        %v1184 = vmul.f32 %v1161, %v1180
        %v1185 = vmul.f32 %v1163, %v1181
        %v1186 = vmul.f32 %v1165, %v1182
        %v1187 = vmul.f32 %v1167, %v1183
        %v1188 = vpack.c.bf16 %v1184, %v1184
        %v1189 = vpack.c.bf16 %v1185, %v1185
        %v1190 = vpack.c.bf16 %v1186, %v1186
        %v1191 = vpack.c.bf16 %v1187, %v1187
        %vm1192 = vcmask 60416
        %1193 = vst.msk [vmem:[%s415] sm:$0xf] %vm1192, %v1188
        %1194 = vst.msk [vmem:[%s415 + $0x4] sm:$0xf] %vm1192, %v1189
        %1195 = vst.msk [vmem:[%s415 + $0x8] sm:$0xf] %vm1192, %v1190
        %1196 = vst.msk [vmem:[%s415 + $0xc] sm:$0xf] %vm1192, %v1191
        %v1198 = vsel %vm949, %v1188, 0
        %vm1200 = vcmask 1043456
        %v1202 = vsel %vm1200, %v940, 0
        %1204 = vmatprep.subr.bf16.mxu0 0
        %1205 = vmatpush1.bf16.msra.mxu0 %v1202
        %1206 = vmatprep.subr.bf16.mxu0 0
        %1207 = vmatpush1.bf16.msra.mxu0 0
        %1208 = vmatprep.subr.bf16.mxu0 0
        %1209 = vmatpush1.bf16.msra.mxu0 0
        %1210 = vmatprep.subr.bf16.mxu0 0
        %1211 = vmatpush1.bf16.msra.mxu0 0
        %1212 = vmatprep.subr.bf16.mxu0 0
        %1213 = vmatpush1.bf16.msra.mxu0 0
        %1214 = vmatprep.subr.bf16.mxu0 0
        %1215 = vmatpush1.bf16.msra.mxu0 0
        %1216 = vmatprep.subr.bf16.mxu0 0
        %1217 = vmatpush1.bf16.msra.mxu0 0
        %1218 = vmatprep.subr.bf16.mxu0 0
        %1219 = vmatpush1.bf16.msra.mxu0 0
        %1220 = vmatprep.subr.bf16.mxu0 0
        %1221 = vmatpush1.bf16.msra.mxu0 0
        %1222 = vmatprep.subr.bf16.mxu0 0
        %1223 = vmatpush1.bf16.msra.mxu0 0
        %1224 = vmatprep.subr.bf16.mxu0 0
        %1225 = vmatpush1.bf16.msra.mxu0 0
        %1226 = vmatprep.subr.bf16.mxu0 0
        %1227 = vmatpush1.bf16.msra.mxu0 0
        %1228 = vmatprep.subr.bf16.mxu0 0
        %1229 = vmatpush1.bf16.msra.mxu0 0
        %1230 = vmatprep.subr.bf16.mxu0 0
        %1231 = vmatpush1.bf16.msra.mxu0 0
        %1232 = vmatprep.subr.bf16.mxu0 0
        %1233 = vmatpush1.bf16.msra.mxu0 0
        %1234 = vmatprep.subr.bf16.mxu0 0
        %1235 = vmatpush1.bf16.msra.mxu0 0
        %1236 = vmatprep.mubr.bf16.mxu0 0
        %1237 = vmatmul.mubr.bf16.gmra.mrb[0].mxu0 %v1198
        %v1238 = vpop.f32.mrb[0].mxu0
        %v1239 = vadd.f32 0.0, %v1238
        %v1240 = vpop.f32.mrb[0].mxu0
        %v1241 = vpop.f32.mrb[0].mxu0
        %v1242 = vpop.f32.mrb[0].mxu0
        %1243 = vdwg.mxu0
        %v1245 = vsel %vm949, %v1189, 0
        %v1248 = vsel %vm1200, %v941, 0
        %1250 = vmatprep.subr.bf16.mxu0 0
        %1251 = vmatpush1.bf16.msra.mxu0 %v1248
        %1252 = vmatprep.subr.bf16.mxu0 0
        %1253 = vmatpush1.bf16.msra.mxu0 0
        %1254 = vmatprep.subr.bf16.mxu0 0
        %1255 = vmatpush1.bf16.msra.mxu0 0
        %1256 = vmatprep.subr.bf16.mxu0 0
        %1257 = vmatpush1.bf16.msra.mxu0 0
        %1258 = vmatprep.subr.bf16.mxu0 0
        %1259 = vmatpush1.bf16.msra.mxu0 0
        %1260 = vmatprep.subr.bf16.mxu0 0
        %1261 = vmatpush1.bf16.msra.mxu0 0
        %1262 = vmatprep.subr.bf16.mxu0 0
        %1263 = vmatpush1.bf16.msra.mxu0 0
        %1264 = vmatprep.subr.bf16.mxu0 0
        %1265 = vmatpush1.bf16.msra.mxu0 0
        %1266 = vmatprep.subr.bf16.mxu0 0
        %1267 = vmatpush1.bf16.msra.mxu0 0
        %1268 = vmatprep.subr.bf16.mxu0 0
        %1269 = vmatpush1.bf16.msra.mxu0 0
        %1270 = vmatprep.subr.bf16.mxu0 0
        %1271 = vmatpush1.bf16.msra.mxu0 0
        %1272 = vmatprep.subr.bf16.mxu0 0
        %1273 = vmatpush1.bf16.msra.mxu0 0
        %1274 = vmatprep.subr.bf16.mxu0 0
        %1275 = vmatpush1.bf16.msra.mxu0 0
        %1276 = vmatprep.subr.bf16.mxu0 0
        %1277 = vmatpush1.bf16.msra.mxu0 0
        %1278 = vmatprep.subr.bf16.mxu0 0
        %1279 = vmatpush1.bf16.msra.mxu0 0
        %1280 = vmatprep.subr.bf16.mxu0 0
        %1281 = vmatpush1.bf16.msra.mxu0 0
        %1282 = vmatprep.mubr.bf16.mxu0 0
        %1283 = vmatmul.mubr.bf16.gmra.mrb[0].mxu0 %v1245
        %v1284 = vpop.f32.mrb[0].mxu0
        %v1285 = vadd.f32 0.0, %v1284
        %v1286 = vpop.f32.mrb[0].mxu0
        %v1287 = vpop.f32.mrb[0].mxu0
        %v1288 = vpop.f32.mrb[0].mxu0
        %1289 = vdwg.mxu0
        %v1291 = vsel %vm949, %v1190, 0
        %v1294 = vsel %vm1200, %v942, 0
        %1296 = vmatprep.subr.bf16.mxu0 0
        %1297 = vmatpush1.bf16.msra.mxu0 %v1294
        %1298 = vmatprep.subr.bf16.mxu0 0
        %1299 = vmatpush1.bf16.msra.mxu0 0
        %1300 = vmatprep.subr.bf16.mxu0 0
        %1301 = vmatpush1.bf16.msra.mxu0 0
        %1302 = vmatprep.subr.bf16.mxu0 0
        %1303 = vmatpush1.bf16.msra.mxu0 0
        %1304 = vmatprep.subr.bf16.mxu0 0
        %1305 = vmatpush1.bf16.msra.mxu0 0
        %1306 = vmatprep.subr.bf16.mxu0 0
        %1307 = vmatpush1.bf16.msra.mxu0 0
        %1308 = vmatprep.subr.bf16.mxu0 0
        %1309 = vmatpush1.bf16.msra.mxu0 0
        %1310 = vmatprep.subr.bf16.mxu0 0
        %1311 = vmatpush1.bf16.msra.mxu0 0
        %1312 = vmatprep.subr.bf16.mxu0 0
        %1313 = vmatpush1.bf16.msra.mxu0 0
        %1314 = vmatprep.subr.bf16.mxu0 0
        %1315 = vmatpush1.bf16.msra.mxu0 0
        %1316 = vmatprep.subr.bf16.mxu0 0
        %1317 = vmatpush1.bf16.msra.mxu0 0
        %1318 = vmatprep.subr.bf16.mxu0 0
        %1319 = vmatpush1.bf16.msra.mxu0 0
        %1320 = vmatprep.subr.bf16.mxu0 0
        %1321 = vmatpush1.bf16.msra.mxu0 0
        %1322 = vmatprep.subr.bf16.mxu0 0
        %1323 = vmatpush1.bf16.msra.mxu0 0
        %1324 = vmatprep.subr.bf16.mxu0 0
        %1325 = vmatpush1.bf16.msra.mxu0 0
        %1326 = vmatprep.subr.bf16.mxu0 0
        %1327 = vmatpush1.bf16.msra.mxu0 0
        %1328 = vmatprep.mubr.bf16.mxu0 0
        %1329 = vmatmul.mubr.bf16.gmra.mrb[0].mxu0 %v1291
        %v1330 = vpop.f32.mrb[0].mxu0
        %v1331 = vadd.f32 0.0, %v1330
        %v1332 = vpop.f32.mrb[0].mxu0
        %v1333 = vpop.f32.mrb[0].mxu0
        %v1334 = vpop.f32.mrb[0].mxu0
        %1335 = vdwg.mxu0
        %v1337 = vsel %vm949, %v1191, 0
        %v1340 = vsel %vm1200, %v943, 0
        %1342 = vmatprep.subr.bf16.mxu0 0
        %1343 = vmatpush1.bf16.msra.mxu0 %v1340
        %1344 = vmatprep.subr.bf16.mxu0 0
        %1345 = vmatpush1.bf16.msra.mxu0 0
        %1346 = vmatprep.subr.bf16.mxu0 0
        %1347 = vmatpush1.bf16.msra.mxu0 0
        %1348 = vmatprep.subr.bf16.mxu0 0
        %1349 = vmatpush1.bf16.msra.mxu0 0
        %1350 = vmatprep.subr.bf16.mxu0 0
        %1351 = vmatpush1.bf16.msra.mxu0 0
        %1352 = vmatprep.subr.bf16.mxu0 0
        %1353 = vmatpush1.bf16.msra.mxu0 0
        %1354 = vmatprep.subr.bf16.mxu0 0
        %1355 = vmatpush1.bf16.msra.mxu0 0
        %1356 = vmatprep.subr.bf16.mxu0 0
        %1357 = vmatpush1.bf16.msra.mxu0 0
        %1358 = vmatprep.subr.bf16.mxu0 0
        %1359 = vmatpush1.bf16.msra.mxu0 0
        %1360 = vmatprep.subr.bf16.mxu0 0
        %1361 = vmatpush1.bf16.msra.mxu0 0
        %1362 = vmatprep.subr.bf16.mxu0 0
        %1363 = vmatpush1.bf16.msra.mxu0 0
        %1364 = vmatprep.subr.bf16.mxu0 0
        %1365 = vmatpush1.bf16.msra.mxu0 0
        %1366 = vmatprep.subr.bf16.mxu0 0
        %1367 = vmatpush1.bf16.msra.mxu0 0
        %1368 = vmatprep.subr.bf16.mxu0 0
        %1369 = vmatpush1.bf16.msra.mxu0 0
        %1370 = vmatprep.subr.bf16.mxu0 0
        %1371 = vmatpush1.bf16.msra.mxu0 0
        %1372 = vmatprep.subr.bf16.mxu0 0
        %1373 = vmatpush1.bf16.msra.mxu0 0
        %1374 = vmatprep.mubr.bf16.mxu0 0
        %1375 = vmatmul.mubr.bf16.gmra.mrb[0].mxu0 %v1337
        %v1376 = vpop.f32.mrb[0].mxu0
        %v1377 = vadd.f32 0.0, %v1376
        %v1378 = vpop.f32.mrb[0].mxu0
        %v1379 = vpop.f32.mrb[0].mxu0
        %v1380 = vpop.f32.mrb[0].mxu0
        %1381 = vdwg.mxu0
        %v1382 = vcombine.low %v1239, %v1331
        %v1383 = vcombine.high %v1239, %v1331
        %v1385 = vunpack.c.l.s4 1983009808
        %v1386 = vunpack.c.0.s8 %v1385
        %v1387 = vlaneseq
        %v1388 = vshrl.u32 %v1387, 7
        %v1389 = vsub.s32 %v1386, %v1388
        %v1390 = vrot.slane %v1382, %v1389
        %v1392 = vunpack.c.l.s4 1983009808
        %v1393 = vunpack.c.0.s8 %v1392
        %v1394 = vlaneseq
        %v1395 = vshrl.u32 %v1394, 7
        %v1396 = vsub.s32 %v1393, %v1395
        %v1397 = vrot.slane %v1383, %v1396
        %v1398 = vcombine.low %v1285, %v1377
        %v1399 = vcombine.high %v1285, %v1377
        %v1401 = vunpack.c.l.s4 1983009808
        %v1402 = vunpack.c.0.s8 %v1401
        %v1403 = vlaneseq
        %v1404 = vshrl.u32 %v1403, 7
        %v1405 = vsub.s32 %v1402, %v1404
        %v1406 = vrot.slane %v1398, %v1405
        %v1408 = vunpack.c.l.s4 1983009808
        %v1409 = vunpack.c.0.s8 %v1408
        %v1410 = vlaneseq
        %v1411 = vshrl.u32 %v1410, 7
        %v1412 = vsub.s32 %v1409, %v1411
        %v1413 = vrot.slane %v1399, %v1412
        %v1414 = vcombine.low %v1390, %v1406
        %v1415 = vcombine.high %v1390, %v1406
        %v1417 = vunpack.c.l.s4 1934713408
        %v1418 = vunpack.c.0.s8 %v1417
        %v1419 = vlaneseq
        %v1420 = vshrl.u32 %v1419, 7
        %v1421 = vsub.s32 %v1418, %v1420
        %v1422 = vrot.slane %v1414, %v1421
        %v1424 = vunpack.c.l.s4 1934713408
        %v1425 = vunpack.c.0.s8 %v1424
        %v1426 = vlaneseq
        %v1427 = vshrl.u32 %v1426, 7
        %v1428 = vsub.s32 %v1425, %v1427
        %v1429 = vrot.slane %v1415, %v1428
        %v1430 = vcombine.low %v1397, %v1413
        %v1431 = vcombine.high %v1397, %v1413
        %v1433 = vunpack.c.l.s4 1934713408
        %v1434 = vunpack.c.0.s8 %v1433
        %v1435 = vlaneseq
        %v1436 = vshrl.u32 %v1435, 7
        %v1437 = vsub.s32 %v1434, %v1436
        %v1438 = vrot.slane %v1430, %v1437
        %v1440 = vunpack.c.l.s4 1934713408
        %v1441 = vunpack.c.0.s8 %v1440
        %v1442 = vlaneseq
        %v1443 = vshrl.u32 %v1442, 7
        %v1444 = vsub.s32 %v1441, %v1443
        %v1445 = vrot.slane %v1431, %v1444
        %v1446 = vcombine.high %v1422, 0.0
        %v1447 = vcombine.high %v1429, 0.0
        %v1448 = vcombine.high %v1438, 0.0
        %v1449 = vcombine.high %v1445, 0.0
        %v1450 = vcombine.low %v1422, %v1429
        %v1452 = vunpack.c.l.s4 1983009808
        %v1453 = vunpack.c.0.s8 %v1452
        %v1454 = vlaneseq
        %v1455 = vshrl.u32 %v1454, 7
        %v1456 = vsub.s32 %v1453, %v1455
        %v1457 = vrot.slane %v1450, %v1456
        %v1458 = vcombine.low %v1446, %v1447
        %v1460 = vunpack.c.l.s4 1983009808
        %v1461 = vunpack.c.0.s8 %v1460
        %v1462 = vlaneseq
        %v1463 = vshrl.u32 %v1462, 7
        %v1464 = vsub.s32 %v1461, %v1463
        %v1465 = vrot.slane %v1458, %v1464
        %v1466 = vcombine.low %v1438, %v1445
        %v1468 = vunpack.c.l.s4 1983009808
        %v1469 = vunpack.c.0.s8 %v1468
        %v1470 = vlaneseq
        %v1471 = vshrl.u32 %v1470, 7
        %v1472 = vsub.s32 %v1469, %v1471
        %v1473 = vrot.slane %v1466, %v1472
        %v1474 = vcombine.low %v1448, %v1449
        %v1476 = vunpack.c.l.s4 1983009808
        %v1477 = vunpack.c.0.s8 %v1476
        %v1478 = vlaneseq
        %v1479 = vshrl.u32 %v1478, 7
        %v1480 = vsub.s32 %v1477, %v1479
        %v1481 = vrot.slane %v1474, %v1480
        %v1482 = vcombine.low %v1457, %v1465
        %v1483 = vcombine.high %v1457, %v1465
        %v1485 = vunpack.c.l.s4 1934713408
        %v1486 = vunpack.c.0.s8 %v1485
        %v1487 = vlaneseq
        %v1488 = vshrl.u32 %v1487, 7
        %v1489 = vsub.s32 %v1486, %v1488
        %v1490 = vrot.slane %v1482, %v1489
        %v1492 = vunpack.c.l.s4 1934713408
        %v1493 = vunpack.c.0.s8 %v1492
        %v1494 = vlaneseq
        %v1495 = vshrl.u32 %v1494, 7
        %v1496 = vsub.s32 %v1493, %v1495
        %v1497 = vrot.slane %v1483, %v1496
        %v1498 = vcombine.low %v1473, %v1481
        %v1499 = vcombine.high %v1473, %v1481
        %v1501 = vunpack.c.l.s4 1934713408
        %v1502 = vunpack.c.0.s8 %v1501
        %v1503 = vlaneseq
        %v1504 = vshrl.u32 %v1503, 7
        %v1505 = vsub.s32 %v1502, %v1504
        %v1506 = vrot.slane %v1498, %v1505
        %v1508 = vunpack.c.l.s4 1934713408
        %v1509 = vunpack.c.0.s8 %v1508
        %v1510 = vlaneseq
        %v1511 = vshrl.u32 %v1510, 7
        %v1512 = vsub.s32 %v1509, %v1511
        %v1513 = vrot.slane %v1499, %v1512
        %v1514 = vcombine.low %v1490, %v1506
        %v1515 = vcombine.high %v1490, %v1506
        %v1516 = vcombine.low %v1497, %v1513
        %v1517 = vcombine.high %v1497, %v1513
        %1519 = vrot.lane.b32.xlu0 %v1515, 8
        %v1520 = vpop.permute.xlu0 %1519
        %1523 = vrot.lane.b32.xlu0 %v1516, 16
        %v1524 = vpop.permute.xlu0 %1523
        %1527 = vrot.lane.b32.xlu0 %v1517, 24
        %v1528 = vpop.permute.xlu0 %1527
        %v1530 = vsel %vm949, %v1514, %v1520
        %vm1531 = vcmask 130048
        %v1532 = vsel %vm1531, %v1530, %v1524
        %vm1533 = vcmask 195584
        %v1534 = vsel %vm1533, %v1532, %v1528
        %v1535 = vpack.c.bf16 %v1534, %v1534
        %v1536 = vld [vmem:[%s3] sm:$0xf]
        %v1537 = vld [vmem:[%s3 + $0x4] sm:$0xf]
        %v1538 = vld [vmem:[%s3 + $0x8] sm:$0xf]
        %v1539 = vld [vmem:[%s3 + $0xc] sm:$0xf]
        %v1540 = vld [vmem:[%s4] sm:$0x1]
        %v1542 = vlaneseq
        %v1543 = vshrl.u32 %v1542, 7
        %v1544 = vsub.s32 0, %v1543
        %v1545 = vrot.slane %v1540, %v1544
        %v1551 = vunpack.c.l.b16 %v1536
        %v1552 = vunpack.c.l.b16 %v1537
        %v1553 = vunpack.c.l.b16 %v1538
        %v1554 = vunpack.c.l.b16 %v1539
        %v1555 = vpack.c.b16 %v1552, %v1551
        %v1556 = vpack.c.b16 %v1554, %v1553
        %v1560 = vsel %vm446, %v1535, 0
        %1562 = vmatprep.subr.bf16.mxu0 0
        %1563 = vmatpush1.bf16.msra.mxu0 %v1555
        %1564 = vmatprep.subr.bf16.mxu0 0
        %1565 = vmatpush1.bf16.msra.mxu0 %v1556
        %1566 = vmatprep.subr.bf16.mxu0 0
        %1567 = vmatpush1.bf16.msra.mxu0 0
        %1568 = vmatprep.subr.bf16.mxu0 0
        %1569 = vmatpush1.bf16.msra.mxu0 0
        %1570 = vmatprep.subr.bf16.mxu0 0
        %1571 = vmatpush1.bf16.msra.mxu0 0
        %1572 = vmatprep.subr.bf16.mxu0 0
        %1573 = vmatpush1.bf16.msra.mxu0 0
        %1574 = vmatprep.subr.bf16.mxu0 0
        %1575 = vmatpush1.bf16.msra.mxu0 0
        %1576 = vmatprep.subr.bf16.mxu0 0
        %1577 = vmatpush1.bf16.msra.mxu0 0
        %1578 = vmatprep.subr.bf16.mxu0 0
        %1579 = vmatpush1.bf16.msra.mxu0 0
        %1580 = vmatprep.subr.bf16.mxu0 0
        %1581 = vmatpush1.bf16.msra.mxu0 0
        %1582 = vmatprep.subr.bf16.mxu0 0
        %1583 = vmatpush1.bf16.msra.mxu0 0
        %1584 = vmatprep.subr.bf16.mxu0 0
        %1585 = vmatpush1.bf16.msra.mxu0 0
        %1586 = vmatprep.subr.bf16.mxu0 0
        %1587 = vmatpush1.bf16.msra.mxu0 0
        %1588 = vmatprep.subr.bf16.mxu0 0
        %1589 = vmatpush1.bf16.msra.mxu0 0
        %1590 = vmatprep.subr.bf16.mxu0 0
        %1591 = vmatpush1.bf16.msra.mxu0 0
        %1592 = vmatprep.subr.bf16.mxu0 0
        %1593 = vmatpush1.bf16.msra.mxu0 0
        %1594 = vmatprep.mubr.bf16.mxu0 0
        %1595 = vmatmul.mubr.bf16.gmra.mrb[0].mxu0 %v1560
        %v1596 = vpop.f32.mrb[0].mxu0
        %v1597 = vadd.f32 %v1545, %v1596
        %v1598 = vpop.f32.mrb[0].mxu0
        %v1599 = vpop.f32.mrb[0].mxu0
        %v1600 = vpop.f32.mrb[0].mxu0
        %1601 = vdwg.mxu0
        %v1602 = vadd.f32 %v421, %v1597
        %v1603 = vld [vmem:[%s5] sm:$0x1]
        %v1604 = vld [vmem:[%s6] sm:$0x1]
        %v1605 = vsel %vm446, %v1602, 0.0
        %1606 = vadd.xlane.f32.xlu0 %v1605
        %v1607 = vpop.xlane.xlu0 %1606
        %v1608 = vrcp.pop 32.0
        %v1609 = vmul.f32 %v1607, %v1608
        %v1610 = vsub.f32 %v1602, %v1609
        %v1611 = vmul.f32 %v1610, %v1610
        %v1612 = vsel %vm446, %v1611, 0.0
        %1613 = vadd.xlane.f32.xlu0 %v1612
        %v1614 = vpop.xlane.xlu0 %1613
        %v1615 = vmul.f32 %v1614, %v1608
        %v1616 = vadd.f32 %v1615, 1e-05
        %v1617 = vrsqrt.pop %v1616
        %v1618 = vmul.f32 %v1610, %v1617
        %v1620 = vlaneseq
        %v1621 = vshrl.u32 %v1620, 7
        %v1622 = vsub.s32 0, %v1621
        %v1623 = vrot.slane %v1603, %v1622
        %v1625 = vmul.f32 %v1618, %v1623
        %v1627 = vlaneseq
        %v1628 = vshrl.u32 %v1627, 7
        %v1629 = vsub.s32 0, %v1628
        %v1630 = vrot.slane %v1604, %v1629
        %v1632 = vadd.f32 %v1625, %v1630
        %v1633 = vpack.c.bf16 %v1632, %v1632
        %v1634 = vld [vmem:[%s7] sm:$0xf]
        %v1635 = vld [vmem:[%s7 + $0x4] sm:$0xf]
        %v1636 = vld [vmem:[%s7 + $0x8] sm:$0xf]
        %v1637 = vld [vmem:[%s7 + $0xc] sm:$0xf]
        %v1642 = vunpack.c.l.b16 %v1634
        %v1643 = vunpack.c.l.b16 %v1635
        %v1644 = vunpack.c.l.b16 %v1636
        %v1645 = vunpack.c.l.b16 %v1637
        %v1646 = vpack.c.b16 %v1643, %v1642
        %v1647 = vpack.c.b16 %v1645, %v1644
        %v1651 = vsel %vm446, %v1633, 0
        %1653 = vmatprep.subr.bf16.mxu0 0
        %1654 = vmatpush1.bf16.msra.mxu0 %v1646
        %1655 = vmatprep.subr.bf16.mxu0 0
        %1656 = vmatpush1.bf16.msra.mxu0 %v1647
        %1657 = vmatprep.subr.bf16.mxu0 0
        %1658 = vmatpush1.bf16.msra.mxu0 0
        %1659 = vmatprep.subr.bf16.mxu0 0
        %1660 = vmatpush1.bf16.msra.mxu0 0
        %1661 = vmatprep.subr.bf16.mxu0 0
        %1662 = vmatpush1.bf16.msra.mxu0 0
        %1663 = vmatprep.subr.bf16.mxu0 0
        %1664 = vmatpush1.bf16.msra.mxu0 0
        %1665 = vmatprep.subr.bf16.mxu0 0
        %1666 = vmatpush1.bf16.msra.mxu0 0
        %1667 = vmatprep.subr.bf16.mxu0 0
        %1668 = vmatpush1.bf16.msra.mxu0 0
        %1669 = vmatprep.subr.bf16.mxu0 0
        %1670 = vmatpush1.bf16.msra.mxu0 0
        %1671 = vmatprep.subr.bf16.mxu0 0
        %1672 = vmatpush1.bf16.msra.mxu0 0
        %1673 = vmatprep.subr.bf16.mxu0 0
        %1674 = vmatpush1.bf16.msra.mxu0 0
        %1675 = vmatprep.subr.bf16.mxu0 0
        %1676 = vmatpush1.bf16.msra.mxu0 0
        %1677 = vmatprep.subr.bf16.mxu0 0
        %1678 = vmatpush1.bf16.msra.mxu0 0
        %1679 = vmatprep.subr.bf16.mxu0 0
        %1680 = vmatpush1.bf16.msra.mxu0 0
        %1681 = vmatprep.subr.bf16.mxu0 0
        %1682 = vmatpush1.bf16.msra.mxu0 0
        %1683 = vmatprep.subr.bf16.mxu0 0
        %1684 = vmatpush1.bf16.msra.mxu0 0
        %1685 = vmatprep.mubr.bf16.mxu0 0
        %1686 = vmatmul.mubr.bf16.gmra.mrb[0].mxu0 %v1651
        %v1687 = vpop.f32.mrb[0].mxu0
        %v1688 = vadd.f32 0.0, %v1687
        %v1689 = vpop.f32.mrb[0].mxu0
        %v1690 = vpop.f32.mrb[0].mxu0
        %v1691 = vpop.f32.mrb[0].mxu0
        %1692 = vdwg.mxu0
        %v1693 = vmul.f32 %v1688, 0.5
        %v1694 = vmul.f32 %v1688, 0.70710677
        %v1695 = verf.f32.pop %v1694
        %v1696 = vadd.f32 %v1695, 1.0
        %v1697 = vmul.f32 %v1693, %v1696
        %v1698 = vpack.c.bf16 %v1697, %v1697
        %v1699 = vld [vmem:[%s8] sm:$0xf]
        %v1700 = vld [vmem:[%s8 + $0x4] sm:$0xf]
        %v1701 = vld [vmem:[%s8 + $0x8] sm:$0xf]
        %v1702 = vld [vmem:[%s8 + $0xc] sm:$0xf]
        %v1703 = vld [vmem:[%s8 + $0x10] sm:$0xf]
        %v1704 = vld [vmem:[%s8 + $0x14] sm:$0xf]
        %v1705 = vld [vmem:[%s8 + $0x18] sm:$0xf]
        %v1706 = vld [vmem:[%s8 + $0x1c] sm:$0xf]
        %v1707 = vld [vmem:[%s8 + $0x20] sm:$0xf]
        %v1708 = vld [vmem:[%s8 + $0x24] sm:$0xf]
        %v1709 = vld [vmem:[%s8 + $0x28] sm:$0xf]
        %v1710 = vld [vmem:[%s8 + $0x2c] sm:$0xf]
        %v1711 = vld [vmem:[%s8 + $0x30] sm:$0xf]
        %v1712 = vld [vmem:[%s8 + $0x34] sm:$0xf]
        %v1713 = vld [vmem:[%s8 + $0x38] sm:$0xf]
        %v1714 = vld [vmem:[%s8 + $0x3c] sm:$0xf]
        %v1731 = vunpack.c.l.b16 %v1699
        %v1732 = vunpack.c.l.b16 %v1700
        %v1733 = vunpack.c.l.b16 %v1701
        %v1734 = vunpack.c.l.b16 %v1702
        %v1735 = vunpack.c.l.b16 %v1703
        %v1736 = vunpack.c.l.b16 %v1704
        %v1737 = vunpack.c.l.b16 %v1705
        %v1738 = vunpack.c.l.b16 %v1706
        %v1739 = vunpack.c.l.b16 %v1707
        %v1740 = vunpack.c.l.b16 %v1708
        %v1741 = vunpack.c.l.b16 %v1709
        %v1742 = vunpack.c.l.b16 %v1710
        %v1743 = vunpack.c.l.b16 %v1711
        %v1744 = vunpack.c.l.b16 %v1712
        %v1745 = vunpack.c.l.b16 %v1713
        %v1746 = vunpack.c.l.b16 %v1714
        %v1747 = vpack.c.b16 %v1732, %v1731
        %v1748 = vpack.c.b16 %v1734, %v1733
        %v1749 = vpack.c.b16 %v1736, %v1735
        %v1750 = vpack.c.b16 %v1738, %v1737
        %v1751 = vpack.c.b16 %v1740, %v1739
        %v1752 = vpack.c.b16 %v1742, %v1741
        %v1753 = vpack.c.b16 %v1744, %v1743
        %v1754 = vpack.c.b16 %v1746, %v1745
        %1763 = vmatprep.subr.bf16.mxu0 0
        %1764 = vmatpush1.bf16.msra.mxu0 %v1747
        %1765 = vmatprep.subr.bf16.mxu0 0
        %1766 = vmatpush1.bf16.msra.mxu0 %v1748
        %1767 = vmatprep.subr.bf16.mxu0 0
        %1768 = vmatpush1.bf16.msra.mxu0 %v1749
        %1769 = vmatprep.subr.bf16.mxu0 0
        %1770 = vmatpush1.bf16.msra.mxu0 %v1750
        %1771 = vmatprep.subr.bf16.mxu0 0
        %1772 = vmatpush1.bf16.msra.mxu0 %v1751
        %1773 = vmatprep.subr.bf16.mxu0 0
        %1774 = vmatpush1.bf16.msra.mxu0 %v1752
        %1775 = vmatprep.subr.bf16.mxu0 0
        %1776 = vmatpush1.bf16.msra.mxu0 %v1753
        %1777 = vmatprep.subr.bf16.mxu0 0
        %1778 = vmatpush1.bf16.msra.mxu0 %v1754
        %1779 = vmatprep.subr.bf16.mxu0 0
        %1780 = vmatpush1.bf16.msra.mxu0 0
        %1781 = vmatprep.subr.bf16.mxu0 0
        %1782 = vmatpush1.bf16.msra.mxu0 0
        %1783 = vmatprep.subr.bf16.mxu0 0
        %1784 = vmatpush1.bf16.msra.mxu0 0
        %1785 = vmatprep.subr.bf16.mxu0 0
        %1786 = vmatpush1.bf16.msra.mxu0 0
        %1787 = vmatprep.subr.bf16.mxu0 0
        %1788 = vmatpush1.bf16.msra.mxu0 0
        %1789 = vmatprep.subr.bf16.mxu0 0
        %1790 = vmatpush1.bf16.msra.mxu0 0
        %1791 = vmatprep.subr.bf16.mxu0 0
        %1792 = vmatpush1.bf16.msra.mxu0 0
        %1793 = vmatprep.subr.bf16.mxu0 0
        %1794 = vmatpush1.bf16.msra.mxu0 0
        %1795 = vmatprep.mubr.bf16.mxu0 0
        %1796 = vmatmul.mubr.bf16.gmra.mrb[0].mxu0 %v1698
        %v1797 = vpop.f32.mrb[0].mxu0
        %v1798 = vadd.f32 0.0, %v1797
        %v1799 = vpop.f32.mrb[0].mxu0
        %v1800 = vpop.f32.mrb[0].mxu0
        %v1801 = vpop.f32.mrb[0].mxu0
        %1802 = vdwg.mxu0
        %v1803 = vadd.f32 %v1632, %v1798
        %v1804 = vld [vmem:[%s9] sm:$0x1]
        %v1805 = vld [vmem:[%s10] sm:$0x1]
        %v1806 = vsel %vm446, %v1803, 0.0
        %1807 = vadd.xlane.f32.xlu0 %v1806
        %v1808 = vpop.xlane.xlu0 %1807
        %v1809 = vmul.f32 %v1808, %v1608
        %v1810 = vsub.f32 %v1803, %v1809
        %v1811 = vmul.f32 %v1810, %v1810
        %v1812 = vsel %vm446, %v1811, 0.0
        %1813 = vadd.xlane.f32.xlu0 %v1812
        %v1814 = vpop.xlane.xlu0 %1813
        %v1815 = vmul.f32 %v1814, %v1608
        %v1816 = vadd.f32 %v1815, 1e-05
        %v1817 = vrsqrt.pop %v1816
        %v1818 = vmul.f32 %v1810, %v1817
        %v1820 = vlaneseq
        %v1821 = vshrl.u32 %v1820, 7
        %v1822 = vsub.s32 0, %v1821
        %v1823 = vrot.slane %v1804, %v1822
        %v1825 = vmul.f32 %v1818, %v1823
        %v1827 = vlaneseq
        %v1828 = vshrl.u32 %v1827, 7
        %v1829 = vsub.s32 0, %v1828
        %v1830 = vrot.slane %v1805, %v1829
        %v1832 = vadd.f32 %v1825, %v1830
        %1833 = vst.msk [vmem:[%s408] sm:$0xff] %vm446, %v1832
        %s1834 = sand.u32 %s274, 1
        %s1835 = scalar_lea.sflag [#allocation3], %s1834
        %s1836 = sand.u32 %s274, 1
        %s1837 = smul.addr %s1836, 8
        %s1838 = scalar_lea.vmem [#allocation2], %s1837
        %s1839 = sand.u32 %s300, 1
        %s1840 = scalar_lea.sflag [#allocation5], %s1839
        %s1841 = sand.u32 %s300, 1
        %s1842 = smul.addr %s1841, 16
        %s1843 = scalar_lea.vmem [#allocation4], %s1842
        // Predicated region
        $region65: #{tpu_custom_call.1} parent=63 // pred_check
          %p1844 = pneg %p284
        $region66: #{tpu_custom_call.1} parent=63 // pred_check_branch
          %1846 = sbr.rel (%p1844) target = $region68
        $region67: #{tpu_custom_call.1} parent=63 // pred_region
          %s1848 = ssub.s32 128, 128
          %1849 = vsyncadd %s1835, %s1848
          %s1850 = smul.addr %s30, 128
          %s1851 = scalar_lea.hbm %s11, %s1850
          %s1853 = sshll.u32 %s1838, 4
          %s1854 = int_to_ptr.vmem [resolvable:$true] %s1853
          %1856 = dma.vmem_to_hbm [thread:$0]  %s1854, 128, %s1851, %s1835
        $region68: #{tpu_custom_call.1} parent=63 // pred_fallthru
          _
        // Predicated region
        $region69: #{tpu_custom_call.1} parent=63 // pred_check
          %p1857 = pneg %p310
        $region70: #{tpu_custom_call.1} parent=63 // pred_check_branch
          %1859 = sbr.rel (%p1857) target = $region72
        $region71: #{tpu_custom_call.1} parent=63 // pred_region
          %s1861 = ssub.s32 256, 256
          %1862 = vsyncadd %s1840, %s1861
          %s1863 = smul.addr %s30, 4
          %s1864 = smul.addr %s1863, 64
          %s1865 = scalar_lea.hbm %s12, %s1864
          %s1866 = sshll.u32 %s1843, 4
          %s1867 = int_to_ptr.vmem [resolvable:$true] %s1866
          %1872 = dma.vmem_to_hbm [thread:$0]  %s1867, 256, %s1865, %s1840, 64, 64, 4
        $region72: #{tpu_custom_call.1} parent=63 // pred_fallthru
          _
      $region64: #{tpu_custom_call.1} parent=5 // pred_fallthru
        _
      %p1873 = scmp.le.s32.totalorder 2, %s25
      // Predicated region
      $region73: #{tpu_custom_call.1} parent=5 // pred_check
        %p1874 = pneg %p1873
      $region74: #{tpu_custom_call.1} parent=5 // pred_check_branch
        %1876 = sbr.rel (%p1874) target = $region76
      $region75: #{tpu_custom_call.1} parent=5 // pred_region
        %s1877 = ssub.s32 %s25, 2
        // Predicated region
        $region77: #{tpu_custom_call.1} parent=75 // pred_check
          %p1878 = pneg %p290
        $region78: #{tpu_custom_call.1} parent=75 // pred_check_branch
          %1880 = sbr.rel (%p1878) target = $region80
        $region79: #{tpu_custom_call.1} parent=75 // pred_region
          %s1881 = sand.u32 %s275, 1
          %s1882 = scalar_lea.sflag [#allocation3], %s1881
          %s1883 = sand.u32 %s275, 1
          %s1884 = smul.addr %s1883, 8
          %s1885 = scalar_lea.vmem [#allocation2], %s1884
          %1886 = dma.done %s1882, 128
        $region80: #{tpu_custom_call.1} parent=75 // pred_fallthru
          _
        // Predicated region
        $region81: #{tpu_custom_call.1} parent=75 // pred_check
          %p1887 = pneg %p316
        $region82: #{tpu_custom_call.1} parent=75 // pred_check_branch
          %1889 = sbr.rel (%p1887) target = $region84
        $region83: #{tpu_custom_call.1} parent=75 // pred_region
          %s1890 = sand.u32 %s301, 1
          %s1891 = scalar_lea.sflag [#allocation5], %s1890
          %s1892 = sand.u32 %s301, 1
          %s1893 = smul.addr %s1892, 16
          %s1894 = scalar_lea.vmem [#allocation4], %s1893
          %1895 = dma.done %s1891, 256
        $region84: #{tpu_custom_call.1} parent=75 // pred_fallthru
          _
      $region76: #{tpu_custom_call.1} parent=5 // pred_fallthru
        _
    $region6: #{tpu_custom_call.1} parent=1 // loop_footer
      %s29 = sadd.s32 1, %s25
    $region7: #{tpu_custom_call.1} parent=1 // loop_footer_branch
      %24 = sbr.rel target = $region3
    $region8: #{tpu_custom_call.1} parent=1 // loop_exit
      _
    %1896 = vsyncpa [#allocation3], 1
    %s1897 = scalar_lea.sflag [#allocation3], 1
    %1898 = vsyncpa %s1897, 1
    %1899 = vsyncpa [#allocation5], 1
    %s1900 = scalar_lea.sflag [#allocation5], 1
    %1901 = vsyncpa %s1900, 1

</llo_original>
